<compile_context>
chip_gen: v7x
topology: tpu7x:2x2x1
jax: 0.10.0
libtpu: 0.0.40
codegen_flags: <defaults>
</compile_context>

<pallas_src>
import functools

import jax
import jax.numpy as jnp
from jax.experimental import pallas as pl
from jax.experimental.pallas import tpu as pltpu

RMS_EPS = 1e-6
LEAKY_SLOPE = 0.01          # nn.LeakyReLU default
NEG_INF = -1e30
# approx=True -> softmax denominator reciprocal on the EUP (nearly free slot).
# Set False when bit-comparing against a PyTorch reference softmax.
SOFTMAX_RECIP_APPROX = True


def _round_up(x, m):
    return ((x + m - 1) // m) * m


def _compiler_params(sem, block_bytes):
    # Explicit scoped-VMEM budget (defaults: 16 MiB v5e / 32 MiB v6e, v7x).
    # 3x ~= double-buffering + headroom; capped at 64 MiB so the same config
    # stays legal on v7x (64 MiB physical VMEM per TensorCore).
    vmem = int(min(64 << 20, max(32 << 20, 3 * block_bytes)))
    return pltpu.CompilerParams(dimension_semantics=sem, vmem_limit_bytes=vmem)


# --------------------------------------------------------------------------
# Kernel 1: fused multi-head attention (GB sequences / spans per grid step)
# --------------------------------------------------------------------------
def mha_kernel(*refs, num_heads, masked):
    if masked:
        (q_ref, kv_ref, bias_ref, wq_t_ref, bq_ref, wkv_t_ref, bkv_ref,
         wo_t_ref, bo_ref, out_ref) = refs
    else:
        (q_ref, kv_ref, wq_t_ref, bq_ref, wkv_t_ref, bkv_ref,
         wo_t_ref, bo_ref, out_ref) = refs
        bias_ref = None

    gb, sq, e = q_ref.shape
    skv = kv_ref.shape[1]
    d = e // num_heads
    rows_q = gb * sq
    rows_kv = gb * skv

    # bf16 MXU operands, f32 accumulation (native MXU dtype on v5e/v6e/v7x).
    # Sequence dims are host-padded to multiples of 8, so these (gb,S,E) <->
    # (gb*S,E) reshapes are sublane-aligned (layout-preserving) merges/splits.
    q2 = q_ref[...].reshape(rows_q, e).astype(jnp.bfloat16)
    kv2 = kv_ref[...].reshape(rows_kv, e).astype(jnp.bfloat16)

    # Fused projections over all gb*S rows at once (fills the MXU M dim).
    q_proj = jnp.dot(q2, wq_t_ref[...],
                     preferred_element_type=jnp.float32) + bq_ref[...]
    kv_proj = jnp.dot(kv2, wkv_t_ref[...],
                      preferred_element_type=jnp.float32) + bkv_ref[...]

    q3 = q_proj.reshape(gb, sq, e)
    kv3 = kv_proj.reshape(gb, skv, 2 * e)

    scale = 1.0 / float(d) ** 0.5
    if masked:
        bias = bias_ref[...]            # (gb, 1, skv): 0 valid / -1e30 padded
        # TODO(synk): a fully-masked row (kv_len == 0) degenerates to a uniform
        # average over zero-padded V; guard upstream if empty spans can occur.

    # Per-head loop (static, small).  Scores / PV are dot_generals batched over
    # the gb sequences -- no in-kernel .T of K.  Head outputs are folded
    # straight into the output projection so no sub-128-lane masked stores.
    # TODO(synk): with head_dim d < 128 the score/PV contractions still
    # under-fill the MXU; inherent to the model shape (E=32, H=4 here).
    acc = jnp.zeros((rows_q, e), jnp.float32)
    for h in range(num_heads):
        qh = q3[:, :, h * d:(h + 1) * d].astype(jnp.bfloat16)
        kh = kv3[:, :, h * d:(h + 1) * d].astype(jnp.bfloat16)
        vh = kv3[:, :, e + h * d:e + (h + 1) * d].astype(jnp.bfloat16)

        s = jnp.einsum('bqd,bkd->bqk', qh, kh,
                       preferred_element_type=jnp.float32) * scale
        if masked:
            s = s + bias
        s = s - jnp.max(s, axis=-1, keepdims=True)
        p = jnp.exp(s)
        p = p * pl.reciprocal(jnp.sum(p, axis=-1, keepdims=True),
                              approx=SOFTMAX_RECIP_APPROX)
        oh = jnp.einsum('bqk,bkd->bqd', p.astype(jnp.bfloat16), vh,
                        preferred_element_type=jnp.float32)
        acc = acc + jnp.dot(oh.reshape(rows_q, d).astype(jnp.bfloat16),
                            wo_t_ref[h * d:(h + 1) * d, :],
                            preferred_element_type=jnp.float32)

    out_ref[...] = (acc + bo_ref[...]).reshape(gb, sq, e).astype(out_ref.dtype)


def mha_forward(q, kv, wq_t, bq, wkv_t, bkv, wo_t, bo, num_heads,
                kv_lens=None, target_rows=256):
    """q: (G, Sq, E), kv: (G, Skv, E) -> (G, Sq, E) float32.

    kv_lens: optional per-row valid KV length (python ints).  Key padding is
    handled by a host-precomputed additive bias (no in-kernel iota/where).
    """
    g, sq, e = q.shape
    skv = kv.shape[1]

    sq_p = _round_up(sq, 8)          # sublane-aligned so in-kernel reshapes
    skv_p = _round_up(skv, 8)        # between (gb,S,E) and (gb*S,E) are clean

    masked = (kv_lens is not None) or (skv_p != skv)
    lens = list(kv_lens) if kv_lens is not None else [skv] * g

    if sq_p != sq:
        q = jnp.pad(q, ((0, 0), (0, sq_p - sq), (0, 0)))
    if skv_p != skv:
        kv = jnp.pad(kv, ((0, 0), (0, skv_p - skv), (0, 0)))

    # Sequences per grid step: amortize the ~0.35us/step pipeline overhead and
    # feed the projection matmuls >= target_rows rows of M.
    gb = max(1, min(g, pl.cdiv(target_rows, sq_p)))
    g_p = _round_up(g, gb)
    if g_p != g:
        pad = g_p - g
        q = jnp.pad(q, ((0, pad), (0, 0), (0, 0)))
        kv = jnp.pad(kv, ((0, pad), (0, 0), (0, 0)))
        lens = lens + [skv_p] * pad        # padded rows: output is sliced off

    inputs = [q, kv]
    in_specs = [
        pl.BlockSpec((gb, sq_p, e), lambda i: (i, 0, 0)),
        pl.BlockSpec((gb, skv_p, e), lambda i: (i, 0, 0)),
    ]
    if masked:
        col = jnp.arange(skv_p, dtype=jnp.int32)[None, None, :]
        lim = jnp.asarray(lens, jnp.int32)[:, None, None]
        bias = jnp.where(col < lim, 0.0, NEG_INF).astype(jnp.float32)
        inputs.append(bias)                                   # (Gp, 1, Skv_p)
        in_specs.append(pl.BlockSpec((gb, 1, skv_p), lambda i: (i, 0, 0)))

    inputs += [wq_t, bq, wkv_t, bkv, wo_t, bo]
    # Constant-index weight blocks (bf16).  NOTE: for very large E consider
    # pipeline_mode=pl.Buffered(1) here to drop the second (useless) buffer.
    in_specs += [
        pl.BlockSpec((e, e), lambda i: (0, 0)),
        pl.BlockSpec((1, e), lambda i: (0, 0)),
        pl.BlockSpec((e, 2 * e), lambda i: (0, 0)),
        pl.BlockSpec((1, 2 * e), lambda i: (0, 0)),
        pl.BlockSpec((e, e), lambda i: (0, 0)),
        pl.BlockSpec((1, e), lambda i: (0, 0)),
    ]

    block_bytes = (2 * gb * sq_p * e * 4            # q block + out block (f32)
                   + gb * skv_p * e * 4             # kv block (f32)
                   + (gb * skv_p * 4 if masked else 0)
                   + 4 * e * e * 2                  # wq + wkv + wo (bf16)
                   + 4 * e * 4)                     # bias vectors (f32)

    out = pl.pallas_call(
        functools.partial(mha_kernel, num_heads=num_heads, masked=masked),
        out_shape=jax.ShapeDtypeStruct((g_p, sq_p, e), jnp.float32),
        grid=(g_p // gb,),
        in_specs=in_specs,
        out_specs=pl.BlockSpec((gb, sq_p, e), lambda i: (i, 0, 0)),
        compiler_params=_compiler_params(("parallel",), block_bytes),
    )(*inputs)
    return out[:g, :sq, :]


# --------------------------------------------------------------------------
# Kernel 2: residual + RMSNorm1 + FFN (F-chunked reduction) + residual
#           + RMSNorm2, tiled over the flattened (N*S) token rows.
# --------------------------------------------------------------------------
def post_kernel(x_ref, attn_ref, ln1_ref, w1_ref, b1_ref, w2_ref, b2_ref,
                ln2_ref, out_ref, h_sc, acc_sc):
    f_idx = pl.program_id(1)

    # First F-chunk: residual add + RMSNorm1, zero the FFN accumulator.
    # TODO(synk): dropout1/dropout2 are identity (eval-mode); no stochastic
    # dropout is applied here.
    @pl.when(f_idx == 0)
    def _():
        h = x_ref[...].astype(jnp.float32) + attn_ref[...].astype(jnp.float32)
        ms = jnp.mean(h * h, axis=-1, keepdims=True)
        h_sc[...] = h * jax.lax.rsqrt(ms + RMS_EPS) * ln1_ref[...]   # RMSNorm1
        acc_sc[...] = jnp.zeros_like(acc_sc)

    # One F-chunk of Linear -> LeakyReLU -> Linear, accumulated in f32; the
    # full (TM, F) intermediate is never materialized (no spills, bounded VMEM).
    f = jnp.dot(h_sc[...].astype(jnp.bfloat16), w1_ref[...],
                preferred_element_type=jnp.float32) + b1_ref[...]
    f = jnp.where(f >= 0, f, LEAKY_SLOPE * f)          # LeakyReLU, f32 on VPU
    acc_sc[...] += jnp.dot(f.astype(jnp.bfloat16), w2_ref[...],
                           preferred_element_type=jnp.float32)

    # Last F-chunk: second residual + RMSNorm2 -> output tile.
    @pl.when(f_idx == pl.num_programs(1) - 1)
    def _():
        y = h_sc[...] + acc_sc[...] + b2_ref[...]
        ms = jnp.mean(y * y, axis=-1, keepdims=True)
        out_ref[...] = (y * jax.lax.rsqrt(ms + RMS_EPS)
                        * ln2_ref[...]).astype(out_ref.dtype)        # RMSNorm2


def post_block(x, attn_out, ln1_w, w1_t, b1, w2_t, b2, ln2_w, *,
               tm=512, tf=512):
    n, s, e = x.shape
    m = n * s
    f_dim = w1_t.shape[1]

    x2 = x.reshape(m, e)
    a2 = attn_out.reshape(m, e).astype(x.dtype)

    tm_blk = m if m <= tm else (tm // 8) * 8
    m_p = _round_up(m, tm_blk)
    if m_p != m:
        x2 = jnp.pad(x2, ((0, m_p - m), (0, 0)))
        a2 = jnp.pad(a2, ((0, m_p - m), (0, 0)))

    tf_blk = f_dim if f_dim <= tf else tf
    f_p = _round_up(f_dim, tf_blk)
    w1p, b1p, w2p = w1_t, b1.reshape(1, f_dim), w2_t
    if f_p != f_dim:               # zero-padded F chunks contribute nothing
        w1p = jnp.pad(w1p, ((0, 0), (0, f_p - f_dim)))
        b1p = jnp.pad(b1p, ((0, 0), (0, f_p - f_dim)))
        w2p = jnp.pad(w2p, ((0, f_p - f_dim), (0, 0)))

    grid = (m_p // tm_blk, f_p // tf_blk)    # rows parallel, F reduction last

    block_bytes = (3 * tm_blk * e * 4                  # x + attn + out tiles
                   + 2 * e * tf_blk * 2                # w1 + w2 chunks (bf16)
                   + (3 * e + tf_blk) * 4              # ln1/ln2/b2/b1 vectors
                   + 2 * tm_blk * e * 4)               # h / acc scratch

    out = pl.pallas_call(
        post_kernel,
        out_shape=jax.ShapeDtypeStruct((m_p, e), x.dtype),
        grid=grid,
        in_specs=[
            pl.BlockSpec((tm_blk, e), lambda i, j: (i, 0)),
            pl.BlockSpec((tm_blk, e), lambda i, j: (i, 0)),
            pl.BlockSpec((1, e), lambda i, j: (0, 0)),
            pl.BlockSpec((e, tf_blk), lambda i, j: (0, j)),
            pl.BlockSpec((1, tf_blk), lambda i, j: (0, j)),
            pl.BlockSpec((tf_blk, e), lambda i, j: (j, 0)),
            pl.BlockSpec((1, e), lambda i, j: (0, 0)),
            pl.BlockSpec((1, e), lambda i, j: (0, 0)),
        ],
        out_specs=pl.BlockSpec((tm_blk, e), lambda i, j: (i, 0)),
        scratch_shapes=[pltpu.VMEM((tm_blk, e), jnp.float32),
                        pltpu.VMEM((tm_blk, e), jnp.float32)],
        compiler_params=_compiler_params(("parallel", "arbitrary"),
                                         block_bytes),
    )(x2, a2, ln1_w.reshape(1, e), w1p, b1p, w2p, b2.reshape(1, e),
      ln2_w.reshape(1, e))
    return out[:m].reshape(n, s, e)


# --------------------------------------------------------------------------
# Parameters (weights stored pre-transposed / fused, bf16, on the host)
# --------------------------------------------------------------------------
def init_params(key, hidden_dim, ff_dim):
    ks = jax.random.split(key, 12)
    scale = 0.02
    e, f = hidden_dim, ff_dim
    bf = jnp.bfloat16

    def lin(k, out_d, in_d):
        return scale * jax.random.normal(k, (out_d, in_d), jnp.float32)

    self_wq, self_wk, self_wv, self_wo = (lin(ks[i], e, e) for i in range(4))
    cross_wq, cross_wk, cross_wv, cross_wo = (lin(ks[i], e, e)
                                              for i in range(4, 8))
    ff_w1 = lin(ks[8], f, e)
    ff_b1 = scale * jax.random.normal(ks[9], (f,), jnp.float32)
    ff_w2 = lin(ks[10], e, f)
    ff_b2 = scale * jax.random.normal(ks[11], (e,), jnp.float32)

    zeros = lambda shp: jnp.zeros(shp, jnp.float32)
    return {
        # self-attention MHA (pre-transposed, K/V fused, bf16; zero biases so
        # a reference MHA with in_proj / out_proj biases can be loaded too)
        "self_wq_t": self_wq.T.astype(bf),
        "self_bq": zeros((1, e)),
        "self_wkv_t": jnp.concatenate([self_wk.T, self_wv.T], 1).astype(bf),
        "self_bkv": zeros((1, 2 * e)),
        "self_wo_t": self_wo.T.astype(bf),
        "self_bo": zeros((1, e)),
        # cross-attention MHA
        "cross_wq_t": cross_wq.T.astype(bf),
        "cross_bq": zeros((1, e)),
        "cross_wkv_t": jnp.concatenate([cross_wk.T, cross_wv.T], 1).astype(bf),
        "cross_bkv": zeros((1, 2 * e)),
        "cross_wo_t": cross_wo.T.astype(bf),
        "cross_bo": zeros((1, e)),
        # feed-forward (bf16 weights, f32 biases)
        "ff_w1_t": ff_w1.T.astype(bf),                               # (E, F)
        "ff_b1": ff_b1,
        "ff_w2_t": ff_w2.T.astype(bf),                               # (F, E)
        "ff_b2": ff_b2,
        # RMSNorm weights
        "ln1_w": jnp.ones((e,), jnp.float32),
        "ln2_w": jnp.ones((e,), jnp.float32),
    }


# --------------------------------------------------------------------------
# CategoryMapBlock forward
# --------------------------------------------------------------------------
def category_map_block_forward(params, x, function_param_token_infos,
                               num_heads):
    """x: (N, S, E).  Mirrors CategoryMapBlock.forward (eval mode)."""
    n, s, e = x.shape

    # 1) self multi-head attention (mask-free specialization when S is
    #    sublane-aligned; otherwise padded keys are masked via the bias path)
    out = mha_forward(x, x,
                      params["self_wq_t"], params["self_bq"],
                      params["self_wkv_t"], params["self_bkv"],
                      params["self_wo_t"], params["self_bo"], num_heads)

    # 2) ONE batched cross-attention over all function-param spans: pad
    #    queries/keys, mask padded keys via a precomputed additive bias,
    #    then scatter the results back over the self-attention output.
    if function_param_token_infos:
        p_cnt = len(function_param_token_infos)
        l_max = max(int(info["token_tensors"].shape[0])
                    for info in function_param_token_infos)
        s_max = max(int(info["encoder_hidden_state"].shape[1])
                    for info in function_param_token_infos)

        q_pad = jnp.zeros((p_cnt, l_max, e), x.dtype)
        kv_pad = jnp.zeros((p_cnt, s_max, e), x.dtype)
        kv_lens = []
        for i, info in enumerate(function_param_token_infos):
            tok = info["token_tensors"]                 # (L, E)
            enc = info["encoder_hidden_state"][0]       # (S_enc, E)
            q_pad = q_pad.at[i, :tok.shape[0], :].set(tok)
            kv_pad = kv_pad.at[i, :enc.shape[0], :].set(enc)
            kv_lens.append(int(enc.shape[0]))

        cross = mha_forward(q_pad, kv_pad,
                            params["cross_wq_t"], params["cross_bq"],
                            params["cross_wkv_t"], params["cross_bkv"],
                            params["cross_wo_t"], params["cross_bo"],
                            num_heads, kv_lens=kv_lens)   # (P, L_max, E)

        for i, info in enumerate(function_param_token_infos):
            r, c0 = info["start"]
            _, c1 = info["end"]
            out = out.at[r, c0:c1, :].set(cross[i, :c1 - c0, :])

    # 3) dropout1 (identity) + RMSNorm1(x + out) + FFN + dropout2 (identity)
    #    + RMSNorm2(residual)
    return post_block(x, out,
                      params["ln1_w"],
                      params["ff_w1_t"], params["ff_b1"],
                      params["ff_w2_t"], params["ff_b2"],
                      params["ln2_w"])


if __name__ == "__main__":
    hidden_dim = 32
    ff_dim = 64
    num_heads = 4
    N, S = 2, 8

    key = jax.random.PRNGKey(0)
    k_param, k_x, k_e1, k_t1, k_e2, k_t2 = jax.random.split(key, 6)

    params = init_params(k_param, hidden_dim, ff_dim)
    x = jax.random.normal(k_x, (N, S, hidden_dim), jnp.float32)

    function_param_token_infos = [
        {
            "start": (0, 2),
            "end": (0, 5),
            "encoder_hidden_state":
                jax.random.normal(k_e1, (1, 6, hidden_dim), jnp.float32),
            "token_tensors":
                jax.random.normal(k_t1, (3, hidden_dim), jnp.float32),
        },
        {
            "start": (1, 1),
            "end": (1, 4),
            "encoder_hidden_state":
                jax.random.normal(k_e2, (1, 5, hidden_dim), jnp.float32),
            "token_tensors":
                jax.random.normal(k_t2, (3, hidden_dim), jnp.float32),
        },
    ]

    y = category_map_block_forward(params, x, function_param_token_infos,
                                   num_heads)
    y = jax.block_until_ready(y)

    assert y.shape == (N, S, hidden_dim), y.shape
    assert bool(jnp.all(jnp.isfinite(y)))
    print("KERNEL_OK")
</pallas_src>

<mosaic_0001>
module attributes {stable_mosaic.version = 11 : i64} {
  func.func @mha_kernel(%arg0: i32, %arg1: memref<2x8x32xf32, #tpu.memory_space<vmem>>, %arg2: memref<2x8x32xf32, #tpu.memory_space<vmem>>, %arg3: memref<32x32xbf16, #tpu.memory_space<vmem>>, %arg4: memref<1x32xf32, #tpu.memory_space<vmem>>, %arg5: memref<32x64xbf16, #tpu.memory_space<vmem>>, %arg6: memref<1x64xf32, #tpu.memory_space<vmem>>, %arg7: memref<32x32xbf16, #tpu.memory_space<vmem>>, %arg8: memref<1x32xf32, #tpu.memory_space<vmem>>, %arg9: memref<2x8x32xf32, #tpu.memory_space<vmem>>) attributes {dimension_semantics = [#tpu.dimension_semantics<parallel>], iteration_bounds = array<i64: 1>, scalar_prefetch = 0 : i64, scratch_operands = 0 : i64, tpu.core_type = #tpu.core_type<tc>, window_params = [{transform_indices = @transform_0, window_bounds = array<i64: 2, 8, 32>}, {transform_indices = @transform_1, window_bounds = array<i64: 2, 8, 32>}, {pipeline_mode = #tpu.pipeline_mode<synchronous>, transform_indices = @transform_2, window_bounds = array<i64: 32, 32>}, {pipeline_mode = #tpu.pipeline_mode<synchronous>, transform_indices = @transform_3, window_bounds = array<i64: 1, 32>}, {pipeline_mode = #tpu.pipeline_mode<synchronous>, transform_indices = @transform_4, window_bounds = array<i64: 32, 64>}, {pipeline_mode = #tpu.pipeline_mode<synchronous>, transform_indices = @transform_5, window_bounds = array<i64: 1, 64>}, {pipeline_mode = #tpu.pipeline_mode<synchronous>, transform_indices = @transform_6, window_bounds = array<i64: 32, 32>}, {pipeline_mode = #tpu.pipeline_mode<synchronous>, transform_indices = @transform_7, window_bounds = array<i64: 1, 32>}, {transform_indices = @transform_8, window_bounds = array<i64: 2, 8, 32>}]} {
    %c0 = arith.constant 0 : index
    %c0_0 = arith.constant 0 : index
    %c0_1 = arith.constant 0 : index
    %0 = vector.load %arg1[%c0, %c0_0, %c0_1] : memref<2x8x32xf32, #tpu.memory_space<vmem>>, vector<2x8x32xf32>
    %1 = vector.shape_cast %0 : vector<2x8x32xf32> to vector<16x32xf32>
    %2 = arith.truncf %1 : vector<16x32xf32> to vector<16x32xbf16>
    %c0_2 = arith.constant 0 : index
    %c0_3 = arith.constant 0 : index
    %c0_4 = arith.constant 0 : index
    %3 = vector.load %arg2[%c0_2, %c0_3, %c0_4] : memref<2x8x32xf32, #tpu.memory_space<vmem>>, vector<2x8x32xf32>
    %4 = vector.shape_cast %3 : vector<2x8x32xf32> to vector<16x32xf32>
    %5 = arith.truncf %4 : vector<16x32xf32> to vector<16x32xbf16>
    %c0_5 = arith.constant 0 : index
    %c0_6 = arith.constant 0 : index
    %6 = vector.load %arg3[%c0_5, %c0_6] : memref<32x32xbf16, #tpu.memory_space<vmem>>, vector<32x32xbf16>
    %cst = arith.constant dense<0.000000e+00> : vector<16x32xf32>
    %7 = tpu.matmul %2, %6, %cst {dimension_numbers = #tpu.dot_dimension_numbers<[1], [0], [0], [1], [0, 0, 1, 1], [], []>} : vector<16x32xbf16>, vector<32x32xbf16>, vector<16x32xf32> -> vector<16x32xf32>
    %c0_7 = arith.constant 0 : index
    %c0_8 = arith.constant 0 : index
    %8 = vector.load %arg4[%c0_7, %c0_8] : memref<1x32xf32, #tpu.memory_space<vmem>>, vector<1x32xf32>
    %9 = vector.broadcast %8 : vector<1x32xf32> to vector<16x32xf32>
    %10 = arith.addf %7, %9 : vector<16x32xf32>
    %c0_9 = arith.constant 0 : index
    %c0_10 = arith.constant 0 : index
    %11 = vector.load %arg5[%c0_9, %c0_10] : memref<32x64xbf16, #tpu.memory_space<vmem>>, vector<32x64xbf16>
    %cst_11 = arith.constant dense<0.000000e+00> : vector<16x64xf32>
    %12 = tpu.matmul %5, %11, %cst_11 {dimension_numbers = #tpu.dot_dimension_numbers<[1], [0], [0], [1], [0, 0, 1, 1], [], []>} : vector<16x32xbf16>, vector<32x64xbf16>, vector<16x64xf32> -> vector<16x64xf32>
    %c0_12 = arith.constant 0 : index
    %c0_13 = arith.constant 0 : index
    %13 = vector.load %arg6[%c0_12, %c0_13] : memref<1x64xf32, #tpu.memory_space<vmem>>, vector<1x64xf32>
    %14 = vector.broadcast %13 : vector<1x64xf32> to vector<16x64xf32>
    %15 = arith.addf %12, %14 : vector<16x64xf32>
    %16 = vector.shape_cast %10 : vector<16x32xf32> to vector<2x8x32xf32>
    %17 = vector.shape_cast %15 : vector<16x64xf32> to vector<2x8x64xf32>
    %cst_14 = arith.constant 0.000000e+00 : f32
    %18 = vector.broadcast %cst_14 : f32 to vector<16x32xf32>
    %19 = vector.extract_strided_slice %16 {offsets = [0, 0, 0], sizes = [2, 8, 8], strides = [1, 1, 1]} : vector<2x8x32xf32> to vector<2x8x8xf32>
    %20 = arith.truncf %19 : vector<2x8x8xf32> to vector<2x8x8xbf16>
    %21 = vector.extract_strided_slice %17 {offsets = [0, 0, 0], sizes = [2, 8, 8], strides = [1, 1, 1]} : vector<2x8x64xf32> to vector<2x8x8xf32>
    %22 = arith.truncf %21 : vector<2x8x8xf32> to vector<2x8x8xbf16>
    %23 = vector.extract_strided_slice %17 {offsets = [0, 0, 32], sizes = [2, 8, 8], strides = [1, 1, 1]} : vector<2x8x64xf32> to vector<2x8x8xf32>
    %24 = arith.truncf %23 : vector<2x8x8xf32> to vector<2x8x8xbf16>
    "tpu.trace_start"() <{level = 10 : i32, message = "bqd,bkd->bqk"}> : () -> ()
    %cst_15 = arith.constant dense<0.000000e+00> : vector<2x8x8xf32>
    %25 = tpu.matmul %20, %22, %cst_15 {dimension_numbers = #tpu.dot_dimension_numbers<[2], [2], [1], [1], [0, 0, 0, 1, 1, 1], [0], [0]>} : vector<2x8x8xbf16>, vector<2x8x8xbf16>, vector<2x8x8xf32> -> vector<2x8x8xf32>
    "tpu.trace_stop"() : () -> ()
    %cst_16 = arith.constant 0.353553385 : f32
    %26 = vector.broadcast %cst_16 : f32 to vector<2x8x8xf32>
    %27 = arith.mulf %25, %26 : vector<2x8x8xf32>
    %cst_17 = arith.constant dense<0xFF800000> : vector<2x8xf32>
    %28 = vector.multi_reduction <maximumf>, %27, %cst_17 [2] : vector<2x8x8xf32> to vector<2x8xf32>
    %29 = vector.shape_cast %28 : vector<2x8xf32> to vector<2x8x1xf32>
    %30 = vector.broadcast %29 : vector<2x8x1xf32> to vector<2x8x8xf32>
    %31 = arith.subf %27, %30 : vector<2x8x8xf32>
    %32 = math.exp %31 : vector<2x8x8xf32>
    %cst_18 = arith.constant dense<0.000000e+00> : vector<2x8xf32>
    %33 = vector.multi_reduction <add>, %32, %cst_18 [2] : vector<2x8x8xf32> to vector<2x8xf32>
    %34 = vector.shape_cast %33 : vector<2x8xf32> to vector<2x8x1xf32>
    %35 = tpu.reciprocal %34 {approx = true} : vector<2x8x1xf32> -> vector<2x8x1xf32>
    %36 = vector.broadcast %35 : vector<2x8x1xf32> to vector<2x8x8xf32>
    %37 = arith.mulf %32, %36 : vector<2x8x8xf32>
    %38 = arith.truncf %37 : vector<2x8x8xf32> to vector<2x8x8xbf16>
    "tpu.trace_start"() <{level = 10 : i32, message = "bqk,bkd->bqd"}> : () -> ()
    %cst_19 = arith.constant dense<0.000000e+00> : vector<2x8x8xf32>
    %39 = tpu.matmul %38, %24, %cst_19 {dimension_numbers = #tpu.dot_dimension_numbers<[2], [1], [1], [2], [0, 0, 0, 1, 1, 2], [0], [0]>} : vector<2x8x8xbf16>, vector<2x8x8xbf16>, vector<2x8x8xf32> -> vector<2x8x8xf32>
    "tpu.trace_stop"() : () -> ()
    %40 = vector.shape_cast %39 : vector<2x8x8xf32> to vector<16x8xf32>
    %41 = arith.truncf %40 : vector<16x8xf32> to vector<16x8xbf16>
    %c0_20 = arith.constant 0 : index
    %c0_21 = arith.constant 0 : index
    %42 = vector.load %arg7[%c0_20, %c0_21] : memref<32x32xbf16, #tpu.memory_space<vmem>>, vector<8x32xbf16>
    %cst_22 = arith.constant dense<0.000000e+00> : vector<16x32xf32>
    %43 = tpu.matmul %41, %42, %cst_22 {dimension_numbers = #tpu.dot_dimension_numbers<[1], [0], [0], [1], [0, 0, 1, 1], [], []>} : vector<16x8xbf16>, vector<8x32xbf16>, vector<16x32xf32> -> vector<16x32xf32>
    %44 = arith.addf %18, %43 : vector<16x32xf32>
    %45 = vector.extract_strided_slice %16 {offsets = [0, 0, 8], sizes = [2, 8, 8], strides = [1, 1, 1]} : vector<2x8x32xf32> to vector<2x8x8xf32>
    %46 = arith.truncf %45 : vector<2x8x8xf32> to vector<2x8x8xbf16>
    %47 = vector.extract_strided_slice %17 {offsets = [0, 0, 8], sizes = [2, 8, 8], strides = [1, 1, 1]} : vector<2x8x64xf32> to vector<2x8x8xf32>
    %48 = arith.truncf %47 : vector<2x8x8xf32> to vector<2x8x8xbf16>
    %49 = vector.extract_strided_slice %17 {offsets = [0, 0, 40], sizes = [2, 8, 8], strides = [1, 1, 1]} : vector<2x8x64xf32> to vector<2x8x8xf32>
    %50 = arith.truncf %49 : vector<2x8x8xf32> to vector<2x8x8xbf16>
    "tpu.trace_start"() <{level = 10 : i32, message = "bqd,bkd->bqk"}> : () -> ()
    %cst_23 = arith.constant dense<0.000000e+00> : vector<2x8x8xf32>
    %51 = tpu.matmul %46, %48, %cst_23 {dimension_numbers = #tpu.dot_dimension_numbers<[2], [2], [1], [1], [0, 0, 0, 1, 1, 1], [0], [0]>} : vector<2x8x8xbf16>, vector<2x8x8xbf16>, vector<2x8x8xf32> -> vector<2x8x8xf32>
    "tpu.trace_stop"() : () -> ()
    %cst_24 = arith.constant 0.353553385 : f32
    %52 = vector.broadcast %cst_24 : f32 to vector<2x8x8xf32>
    %53 = arith.mulf %51, %52 : vector<2x8x8xf32>
    %cst_25 = arith.constant dense<0xFF800000> : vector<2x8xf32>
    %54 = vector.multi_reduction <maximumf>, %53, %cst_25 [2] : vector<2x8x8xf32> to vector<2x8xf32>
    %55 = vector.shape_cast %54 : vector<2x8xf32> to vector<2x8x1xf32>
    %56 = vector.broadcast %55 : vector<2x8x1xf32> to vector<2x8x8xf32>
    %57 = arith.subf %53, %56 : vector<2x8x8xf32>
    %58 = math.exp %57 : vector<2x8x8xf32>
    %cst_26 = arith.constant dense<0.000000e+00> : vector<2x8xf32>
    %59 = vector.multi_reduction <add>, %58, %cst_26 [2] : vector<2x8x8xf32> to vector<2x8xf32>
    %60 = vector.shape_cast %59 : vector<2x8xf32> to vector<2x8x1xf32>
    %61 = tpu.reciprocal %60 {approx = true} : vector<2x8x1xf32> -> vector<2x8x1xf32>
    %62 = vector.broadcast %61 : vector<2x8x1xf32> to vector<2x8x8xf32>
    %63 = arith.mulf %58, %62 : vector<2x8x8xf32>
    %64 = arith.truncf %63 : vector<2x8x8xf32> to vector<2x8x8xbf16>
    "tpu.trace_start"() <{level = 10 : i32, message = "bqk,bkd->bqd"}> : () -> ()
    %cst_27 = arith.constant dense<0.000000e+00> : vector<2x8x8xf32>
    %65 = tpu.matmul %64, %50, %cst_27 {dimension_numbers = #tpu.dot_dimension_numbers<[2], [1], [1], [2], [0, 0, 0, 1, 1, 2], [0], [0]>} : vector<2x8x8xbf16>, vector<2x8x8xbf16>, vector<2x8x8xf32> -> vector<2x8x8xf32>
    "tpu.trace_stop"() : () -> ()
    %66 = vector.shape_cast %65 : vector<2x8x8xf32> to vector<16x8xf32>
    %67 = arith.truncf %66 : vector<16x8xf32> to vector<16x8xbf16>
    %c8 = arith.constant 8 : index
    %c0_28 = arith.constant 0 : index
    %68 = vector.load %arg7[%c8, %c0_28] : memref<32x32xbf16, #tpu.memory_space<vmem>>, vector<8x32xbf16>
    %cst_29 = arith.constant dense<0.000000e+00> : vector<16x32xf32>
    %69 = tpu.matmul %67, %68, %cst_29 {dimension_numbers = #tpu.dot_dimension_numbers<[1], [0], [0], [1], [0, 0, 1, 1], [], []>} : vector<16x8xbf16>, vector<8x32xbf16>, vector<16x32xf32> -> vector<16x32xf32>
    %70 = arith.addf %44, %69 : vector<16x32xf32>
    %71 = vector.extract_strided_slice %16 {offsets = [0, 0, 16], sizes = [2, 8, 8], strides = [1, 1, 1]} : vector<2x8x32xf32> to vector<2x8x8xf32>
    %72 = arith.truncf %71 : vector<2x8x8xf32> to vector<2x8x8xbf16>
    %73 = vector.extract_strided_slice %17 {offsets = [0, 0, 16], sizes = [2, 8, 8], strides = [1, 1, 1]} : vector<2x8x64xf32> to vector<2x8x8xf32>
    %74 = arith.truncf %73 : vector<2x8x8xf32> to vector<2x8x8xbf16>
    %75 = vector.extract_strided_slice %17 {offsets = [0, 0, 48], sizes = [2, 8, 8], strides = [1, 1, 1]} : vector<2x8x64xf32> to vector<2x8x8xf32>
    %76 = arith.truncf %75 : vector<2x8x8xf32> to vector<2x8x8xbf16>
    "tpu.trace_start"() <{level = 10 : i32, message = "bqd,bkd->bqk"}> : () -> ()
    %cst_30 = arith.constant dense<0.000000e+00> : vector<2x8x8xf32>
    %77 = tpu.matmul %72, %74, %cst_30 {dimension_numbers = #tpu.dot_dimension_numbers<[2], [2], [1], [1], [0, 0, 0, 1, 1, 1], [0], [0]>} : vector<2x8x8xbf16>, vector<2x8x8xbf16>, vector<2x8x8xf32> -> vector<2x8x8xf32>
    "tpu.trace_stop"() : () -> ()
    %cst_31 = arith.constant 0.353553385 : f32
    %78 = vector.broadcast %cst_31 : f32 to vector<2x8x8xf32>
    %79 = arith.mulf %77, %78 : vector<2x8x8xf32>
    %cst_32 = arith.constant dense<0xFF800000> : vector<2x8xf32>
    %80 = vector.multi_reduction <maximumf>, %79, %cst_32 [2] : vector<2x8x8xf32> to vector<2x8xf32>
    %81 = vector.shape_cast %80 : vector<2x8xf32> to vector<2x8x1xf32>
    %82 = vector.broadcast %81 : vector<2x8x1xf32> to vector<2x8x8xf32>
    %83 = arith.subf %79, %82 : vector<2x8x8xf32>
    %84 = math.exp %83 : vector<2x8x8xf32>
    %cst_33 = arith.constant dense<0.000000e+00> : vector<2x8xf32>
    %85 = vector.multi_reduction <add>, %84, %cst_33 [2] : vector<2x8x8xf32> to vector<2x8xf32>
    %86 = vector.shape_cast %85 : vector<2x8xf32> to vector<2x8x1xf32>
    %87 = tpu.reciprocal %86 {approx = true} : vector<2x8x1xf32> -> vector<2x8x1xf32>
    %88 = vector.broadcast %87 : vector<2x8x1xf32> to vector<2x8x8xf32>
    %89 = arith.mulf %84, %88 : vector<2x8x8xf32>
    %90 = arith.truncf %89 : vector<2x8x8xf32> to vector<2x8x8xbf16>
    "tpu.trace_start"() <{level = 10 : i32, message = "bqk,bkd->bqd"}> : () -> ()
    %cst_34 = arith.constant dense<0.000000e+00> : vector<2x8x8xf32>
    %91 = tpu.matmul %90, %76, %cst_34 {dimension_numbers = #tpu.dot_dimension_numbers<[2], [1], [1], [2], [0, 0, 0, 1, 1, 2], [0], [0]>} : vector<2x8x8xbf16>, vector<2x8x8xbf16>, vector<2x8x8xf32> -> vector<2x8x8xf32>
    "tpu.trace_stop"() : () -> ()
    %92 = vector.shape_cast %91 : vector<2x8x8xf32> to vector<16x8xf32>
    %93 = arith.truncf %92 : vector<16x8xf32> to vector<16x8xbf16>
    %c16 = arith.constant 16 : index
    %c0_35 = arith.constant 0 : index
    %94 = vector.load %arg7[%c16, %c0_35] : memref<32x32xbf16, #tpu.memory_space<vmem>>, vector<8x32xbf16>
    %cst_36 = arith.constant dense<0.000000e+00> : vector<16x32xf32>
    %95 = tpu.matmul %93, %94, %cst_36 {dimension_numbers = #tpu.dot_dimension_numbers<[1], [0], [0], [1], [0, 0, 1, 1], [], []>} : vector<16x8xbf16>, vector<8x32xbf16>, vector<16x32xf32> -> vector<16x32xf32>
    %96 = arith.addf %70, %95 : vector<16x32xf32>
    %97 = vector.extract_strided_slice %16 {offsets = [0, 0, 24], sizes = [2, 8, 8], strides = [1, 1, 1]} : vector<2x8x32xf32> to vector<2x8x8xf32>
    %98 = arith.truncf %97 : vector<2x8x8xf32> to vector<2x8x8xbf16>
    %99 = vector.extract_strided_slice %17 {offsets = [0, 0, 24], sizes = [2, 8, 8], strides = [1, 1, 1]} : vector<2x8x64xf32> to vector<2x8x8xf32>
    %100 = arith.truncf %99 : vector<2x8x8xf32> to vector<2x8x8xbf16>
    %101 = vector.extract_strided_slice %17 {offsets = [0, 0, 56], sizes = [2, 8, 8], strides = [1, 1, 1]} : vector<2x8x64xf32> to vector<2x8x8xf32>
    %102 = arith.truncf %101 : vector<2x8x8xf32> to vector<2x8x8xbf16>
    "tpu.trace_start"() <{level = 10 : i32, message = "bqd,bkd->bqk"}> : () -> ()
    %cst_37 = arith.constant dense<0.000000e+00> : vector<2x8x8xf32>
    %103 = tpu.matmul %98, %100, %cst_37 {dimension_numbers = #tpu.dot_dimension_numbers<[2], [2], [1], [1], [0, 0, 0, 1, 1, 1], [0], [0]>} : vector<2x8x8xbf16>, vector<2x8x8xbf16>, vector<2x8x8xf32> -> vector<2x8x8xf32>
    "tpu.trace_stop"() : () -> ()
    %cst_38 = arith.constant 0.353553385 : f32
    %104 = vector.broadcast %cst_38 : f32 to vector<2x8x8xf32>
    %105 = arith.mulf %103, %104 : vector<2x8x8xf32>
    %cst_39 = arith.constant dense<0xFF800000> : vector<2x8xf32>
    %106 = vector.multi_reduction <maximumf>, %105, %cst_39 [2] : vector<2x8x8xf32> to vector<2x8xf32>
    %107 = vector.shape_cast %106 : vector<2x8xf32> to vector<2x8x1xf32>
    %108 = vector.broadcast %107 : vector<2x8x1xf32> to vector<2x8x8xf32>
    %109 = arith.subf %105, %108 : vector<2x8x8xf32>
    %110 = math.exp %109 : vector<2x8x8xf32>
    %cst_40 = arith.constant dense<0.000000e+00> : vector<2x8xf32>
    %111 = vector.multi_reduction <add>, %110, %cst_40 [2] : vector<2x8x8xf32> to vector<2x8xf32>
    %112 = vector.shape_cast %111 : vector<2x8xf32> to vector<2x8x1xf32>
    %113 = tpu.reciprocal %112 {approx = true} : vector<2x8x1xf32> -> vector<2x8x1xf32>
    %114 = vector.broadcast %113 : vector<2x8x1xf32> to vector<2x8x8xf32>
    %115 = arith.mulf %110, %114 : vector<2x8x8xf32>
    %116 = arith.truncf %115 : vector<2x8x8xf32> to vector<2x8x8xbf16>
    "tpu.trace_start"() <{level = 10 : i32, message = "bqk,bkd->bqd"}> : () -> ()
    %cst_41 = arith.constant dense<0.000000e+00> : vector<2x8x8xf32>
    %117 = tpu.matmul %116, %102, %cst_41 {dimension_numbers = #tpu.dot_dimension_numbers<[2], [1], [1], [2], [0, 0, 0, 1, 1, 2], [0], [0]>} : vector<2x8x8xbf16>, vector<2x8x8xbf16>, vector<2x8x8xf32> -> vector<2x8x8xf32>
    "tpu.trace_stop"() : () -> ()
    %118 = vector.shape_cast %117 : vector<2x8x8xf32> to vector<16x8xf32>
    %119 = arith.truncf %118 : vector<16x8xf32> to vector<16x8xbf16>
    %c24 = arith.constant 24 : index
    %c0_42 = arith.constant 0 : index
    %120 = vector.load %arg7[%c24, %c0_42] : memref<32x32xbf16, #tpu.memory_space<vmem>>, vector<8x32xbf16>
    %cst_43 = arith.constant dense<0.000000e+00> : vector<16x32xf32>
    %121 = tpu.matmul %119, %120, %cst_43 {dimension_numbers = #tpu.dot_dimension_numbers<[1], [0], [0], [1], [0, 0, 1, 1], [], []>} : vector<16x8xbf16>, vector<8x32xbf16>, vector<16x32xf32> -> vector<16x32xf32>
    %122 = arith.addf %96, %121 : vector<16x32xf32>
    %c0_44 = arith.constant 0 : index
    %c0_45 = arith.constant 0 : index
    %123 = vector.load %arg8[%c0_44, %c0_45] : memref<1x32xf32, #tpu.memory_space<vmem>>, vector<1x32xf32>
    %124 = vector.broadcast %123 : vector<1x32xf32> to vector<16x32xf32>
    %125 = arith.addf %122, %124 : vector<16x32xf32>
    %126 = vector.shape_cast %125 : vector<16x32xf32> to vector<2x8x32xf32>
    %c0_46 = arith.constant 0 : index
    %c0_47 = arith.constant 0 : index
    %c0_48 = arith.constant 0 : index
    %127 = vector.load %arg9[%c0_46, %c0_47, %c0_48] : memref<2x8x32xf32, #tpu.memory_space<vmem>>, vector<2x8x32xf32>
    tpu.vector_store %arg9[%c0_46, %c0_47, %c0_48], %126 {strides = array<i32>} : memref<2x8x32xf32, #tpu.memory_space<vmem>>, vector<2x8x32xf32>,
    return
  }
  func.func @transform_0(%arg0: i32) -> (i32, i32, i32) {
    %c0_i32 = arith.constant 0 : i32
    %c0_i32_0 = arith.constant 0 : i32
    %c0_i32_1 = arith.constant 0 : i32
    return %arg0, %c0_i32, %c0_i32_0 : i32, i32, i32
  }
  func.func @transform_1(%arg0: i32) -> (i32, i32, i32) {
    %c0_i32 = arith.constant 0 : i32
    %c0_i32_0 = arith.constant 0 : i32
    %c0_i32_1 = arith.constant 0 : i32
    return %arg0, %c0_i32, %c0_i32_0 : i32, i32, i32
  }
  func.func @transform_2(%arg0: i32) -> (i32, i32) {
    %c0_i32 = arith.constant 0 : i32
    %c0_i32_0 = arith.constant 0 : i32
    %c0_i32_1 = arith.constant 0 : i32
    return %c0_i32, %c0_i32_0 : i32, i32
  }
  func.func @transform_3(%arg0: i32) -> (i32, i32) {
    %c0_i32 = arith.constant 0 : i32
    %c0_i32_0 = arith.constant 0 : i32
    %c0_i32_1 = arith.constant 0 : i32
    return %c0_i32, %c0_i32_0 : i32, i32
  }
  func.func @transform_4(%arg0: i32) -> (i32, i32) {
    %c0_i32 = arith.constant 0 : i32
    %c0_i32_0 = arith.constant 0 : i32
    %c0_i32_1 = arith.constant 0 : i32
    return %c0_i32, %c0_i32_0 : i32, i32
  }
  func.func @transform_5(%arg0: i32) -> (i32, i32) {
    %c0_i32 = arith.constant 0 : i32
    %c0_i32_0 = arith.constant 0 : i32
    %c0_i32_1 = arith.constant 0 : i32
    return %c0_i32, %c0_i32_0 : i32, i32
  }
  func.func @transform_6(%arg0: i32) -> (i32, i32) {
    %c0_i32 = arith.constant 0 : i32
    %c0_i32_0 = arith.constant 0 : i32
    %c0_i32_1 = arith.constant 0 : i32
    return %c0_i32, %c0_i32_0 : i32, i32
  }
  func.func @transform_7(%arg0: i32) -> (i32, i32) {
    %c0_i32 = arith.constant 0 : i32
    %c0_i32_0 = arith.constant 0 : i32
    %c0_i32_1 = arith.constant 0 : i32
    return %c0_i32, %c0_i32_0 : i32, i32
  }
  func.func @transform_8(%arg0: i32) -> (i32, i32, i32) {
    %c0_i32 = arith.constant 0 : i32
    %c0_i32_0 = arith.constant 0 : i32
    %c0_i32_1 = arith.constant 0 : i32
    return %arg0, %c0_i32, %c0_i32_0 : i32, i32, i32
  }
}

</mosaic_0001>

<llo_original>
// kernel: tpu_custom_call.1
$region0: #{tpu_custom_call.1}
  #allocation0 [shape = 'u32[]', space=smem, size = 0x4, offset = 0x4, fixed_abs, tag = 'smem constant byte address 0x4 - core index']
  #allocation1 [shape = 'u32[144,128]{1,0:T(1,128)}', space=vmem, size = 0x12000, scoped, tag = 'internal scratch']
  %s0 = inlined_call_operand.hbm [shape: f32[2,8,32], index: 0, kind: input, shape index: {}]
  %s1 = inlined_call_operand.hbm [shape: f32[2,8,32], index: 1, kind: input, shape index: {}]
  %s2 = inlined_call_operand.hbm [shape: bf16[32,32], index: 2, kind: input, shape index: {}]
  %s3 = inlined_call_operand.vmem [shape: f32[1,32], index: 3, kind: input, shape index: {}]
  %s4 = inlined_call_operand.hbm [shape: bf16[32,64], index: 4, kind: input, shape index: {}]
  %s5 = inlined_call_operand.vmem [shape: f32[1,64], index: 5, kind: input, shape index: {}]
  %s6 = inlined_call_operand.vmem [shape: bf16[32,32], index: 6, kind: input, shape index: {}]
  %s7 = inlined_call_operand.vmem [shape: f32[1,32], index: 7, kind: input, shape index: {}]
  %s8 = inlined_call_operand.hbm [shape: f32[2,8,32], index: 8, kind: output, shape index: {}]
  %s9 = sld [smem:[#allocation0]]
  $region58: #{tpu_custom_call.1} parent=0
    _
  %s11 = ssub.s32 1, %s9
  %s12 = scalar_select 0, %s11, %s9
  $region1: #{tpu_custom_call.1} parent=0
    #allocation2 [shape = 'u8[8192]{0}', space=vmem, size = 0x2000, scoped, tag = 'input window, operand 0, single buffered']
    #allocation3 [shape = 's32[1]{0}', space=sflag, size = 0x4, scoped, tag = 'scoped memory for tpu_custom_call.1']
    #allocation4 [shape = 's32[1]{0}', space=sflag, size = 0x4, scoped, tag = 'scoped memory for tpu_custom_call.1']
    #allocation5 [shape = 'u8[8192]{0}', space=vmem, size = 0x2000, scoped, tag = 'input window, operand 1, single buffered']
    #allocation6 [shape = 's32[1]{0}', space=sflag, size = 0x4, scoped, tag = 'scoped memory for tpu_custom_call.1']
    #allocation7 [shape = 'u8[8192]{0}', space=vmem, size = 0x2000, scoped, tag = 'input window, operand 2, single buffered']
    #allocation8 [shape = 'u8[8192]{0}', space=vmem, size = 0x2000, scoped, tag = 'input window, operand 4, single buffered']
    #allocation9 [shape = 's32[1]{0}', space=sflag, size = 0x4, scoped, tag = 'scoped memory for tpu_custom_call.1']
    #allocation10 [shape = 'u8[8192]{0}', space=vmem, size = 0x2000, scoped, tag = 'output window, operand 0, single buffered']
    %13 = vsyncpa [#allocation3], 0
    %14 = vsyncpa [#allocation6], 0
    %15 = vsyncpa [#allocation9], 0
    %16 = vsyncpa [#allocation4], 0
    // Predicated region
    $region2: #{tpu_custom_call.1} parent=1 // pred_check
      _
    $region3: #{tpu_custom_call.1} parent=1 // pred_check_branch
      %18 = sbr.rel (0) target = $region5
    $region4: #{tpu_custom_call.1} parent=1 // pred_region
      %s20 = ssub.s32 256, 256
      %21 = vsyncadd [#allocation3], %s20
      %s22 = sshll.u32 [#allocation2], 4
      %s23 = int_to_ptr.vmem [resolvable:$true] %s22
      %28 = dma.hbm_to_vmem [thread:$0]  %s0, 256, %s23, [#allocation3], 128, 128, 8
    $region5: #{tpu_custom_call.1} parent=1 // pred_fallthru
      _
    // Predicated region
    $region6: #{tpu_custom_call.1} parent=1 // pred_check
      _
    $region7: #{tpu_custom_call.1} parent=1 // pred_check_branch
      %30 = sbr.rel (0) target = $region9
    $region8: #{tpu_custom_call.1} parent=1 // pred_region
      %s32 = ssub.s32 256, 256
      %33 = vsyncadd [#allocation6], %s32
      %s34 = sshll.u32 [#allocation5], 4
      %s35 = int_to_ptr.vmem [resolvable:$true] %s34
      %40 = dma.hbm_to_vmem [thread:$0]  %s1, 256, %s35, [#allocation6], 128, 128, 8
    $region9: #{tpu_custom_call.1} parent=1 // pred_fallthru
      _
    // Predicated region
    $region10: #{tpu_custom_call.1} parent=1 // pred_check
      _
    $region11: #{tpu_custom_call.1} parent=1 // pred_check_branch
      %42 = sbr.rel (0) target = $region13
    $region12: #{tpu_custom_call.1} parent=1 // pred_region
      %s44 = ssub.s32 256, 256
      %45 = vsyncadd [#allocation6], %s44
      %s46 = sshll.u32 [#allocation7], 4
      %s47 = int_to_ptr.vmem [resolvable:$true] %s46
      %52 = dma.hbm_to_vmem [thread:$0]  %s2, 256, %s47, [#allocation6], 64, 64, 4
    $region13: #{tpu_custom_call.1} parent=1 // pred_fallthru
      _
    // Predicated region
    $region14: #{tpu_custom_call.1} parent=1 // pred_check
      _
    $region15: #{tpu_custom_call.1} parent=1 // pred_check_branch
      %54 = sbr.rel (0) target = $region17
    $region16: #{tpu_custom_call.1} parent=1 // pred_region
      _
    $region17: #{tpu_custom_call.1} parent=1 // pred_fallthru
      _
    // Predicated region
    $region18: #{tpu_custom_call.1} parent=1 // pred_check
      _
    $region19: #{tpu_custom_call.1} parent=1 // pred_check_branch
      %56 = sbr.rel (0) target = $region21
    $region20: #{tpu_custom_call.1} parent=1 // pred_region
      %s58 = ssub.s32 256, 256
      %59 = vsyncadd [#allocation9], %s58
      %s60 = sshll.u32 [#allocation8], 4
      %s61 = int_to_ptr.vmem [resolvable:$true] %s60
      %66 = dma.hbm_to_vmem [thread:$0]  %s4, 256, %s61, [#allocation9], 64, 64, 4
    $region21: #{tpu_custom_call.1} parent=1 // pred_fallthru
      _
    // Predicated region
    $region22: #{tpu_custom_call.1} parent=1 // pred_check
      _
    $region23: #{tpu_custom_call.1} parent=1 // pred_check_branch
      %68 = sbr.rel (0) target = $region25
    $region24: #{tpu_custom_call.1} parent=1 // pred_region
      _
    $region25: #{tpu_custom_call.1} parent=1 // pred_fallthru
      _
    // Predicated region
    $region26: #{tpu_custom_call.1} parent=1 // pred_check
      _
    $region27: #{tpu_custom_call.1} parent=1 // pred_check_branch
      %70 = sbr.rel (0) target = $region29
    $region28: #{tpu_custom_call.1} parent=1 // pred_region
      _
    $region29: #{tpu_custom_call.1} parent=1 // pred_fallthru
      _
    // Predicated region
    $region30: #{tpu_custom_call.1} parent=1 // pred_check
      _
    $region31: #{tpu_custom_call.1} parent=1 // pred_check_branch
      %72 = sbr.rel (0) target = $region33
    $region32: #{tpu_custom_call.1} parent=1 // pred_region
      _
    $region33: #{tpu_custom_call.1} parent=1 // pred_fallthru
      _
    // Predicated region
    $region34: #{tpu_custom_call.1} parent=1 // pred_check
      _
    $region35: #{tpu_custom_call.1} parent=1 // pred_check_branch
      %74 = sbr.rel (0) target = $region37
    $region36: #{tpu_custom_call.1} parent=1 // pred_region
      %75 = dma.done [#allocation3], 256
    $region37: #{tpu_custom_call.1} parent=1 // pred_fallthru
      _
    // Predicated region
    $region38: #{tpu_custom_call.1} parent=1 // pred_check
      _
    $region39: #{tpu_custom_call.1} parent=1 // pred_check_branch
      %77 = sbr.rel (0) target = $region41
    $region40: #{tpu_custom_call.1} parent=1 // pred_region
      %78 = dma.done [#allocation6], 256
    $region41: #{tpu_custom_call.1} parent=1 // pred_fallthru
      _
    // Predicated region
    $region42: #{tpu_custom_call.1} parent=1 // pred_check
      _
    $region43: #{tpu_custom_call.1} parent=1 // pred_check_branch
      %80 = sbr.rel (0) target = $region45
    $region44: #{tpu_custom_call.1} parent=1 // pred_region
      %81 = dma.done [#allocation6], 256
    $region45: #{tpu_custom_call.1} parent=1 // pred_fallthru
      _
    // Predicated region
    $region46: #{tpu_custom_call.1} parent=1 // pred_check
      _
    $region47: #{tpu_custom_call.1} parent=1 // pred_check_branch
      %83 = sbr.rel (0) target = $region49
    $region48: #{tpu_custom_call.1} parent=1 // pred_region
      %84 = dma.done [#allocation9], 256
    $region49: #{tpu_custom_call.1} parent=1 // pred_fallthru
      _
    %v86 = vld [vmem:[#allocation2] sm:$0xff]
    %v87 = vld [vmem:[#allocation2 + $0x8] sm:$0xff]
    %v88 = vpack.c.bf16 %v87, %v86
    %v89 = vld [vmem:[#allocation5] sm:$0xff]
    %v90 = vld [vmem:[#allocation5 + $0x8] sm:$0xff]
    %v91 = vpack.c.bf16 %v90, %v89
    %v92 = vld [vmem:[#allocation7] sm:$0xf]
    %v93 = vld [vmem:[#allocation7 + $0x4] sm:$0xf]
    %v94 = vld [vmem:[#allocation7 + $0x8] sm:$0xf]
    %v95 = vld [vmem:[#allocation7 + $0xc] sm:$0xf]
    %v96 = vld [vmem:[%s3] sm:$0x1]
    %v98 = vlaneseq
    %v99 = vshrl.u32 %v98, 7
    %v100 = vsub.s32 0, %v99
    %v101 = vrot.slane %v96, %v100
    %v107 = vunpack.c.l.b16 %v92
    %v108 = vunpack.c.l.b16 %v93
    %v109 = vunpack.c.l.b16 %v94
    %v110 = vunpack.c.l.b16 %v95
    %v111 = vpack.c.b16 %v108, %v107
    %v112 = vpack.c.b16 %v110, %v109
    %vm115 = vcmask 261120
    %v117 = vsel %vm115, %v88, 0
    %119 = vmatprep.subr.bf16.mxu0 0
    %120 = vmatpush1.bf16.msra.mxu0 %v111
    %121 = vmatprep.subr.bf16.mxu0 0
    %122 = vmatpush1.bf16.msra.mxu0 %v112
    %123 = vmatprep.subr.bf16.mxu0 0
    %124 = vmatpush1.bf16.msra.mxu0 0
    %125 = vmatprep.subr.bf16.mxu0 0
    %126 = vmatpush1.bf16.msra.mxu0 0
    %127 = vmatprep.subr.bf16.mxu0 0
    %128 = vmatpush1.bf16.msra.mxu0 0
    %129 = vmatprep.subr.bf16.mxu0 0
    %130 = vmatpush1.bf16.msra.mxu0 0
    %131 = vmatprep.subr.bf16.mxu0 0
    %132 = vmatpush1.bf16.msra.mxu0 0
    %133 = vmatprep.subr.bf16.mxu0 0
    %134 = vmatpush1.bf16.msra.mxu0 0
    %135 = vmatprep.subr.bf16.mxu0 0
    %136 = vmatpush1.bf16.msra.mxu0 0
    %137 = vmatprep.subr.bf16.mxu0 0
    %138 = vmatpush1.bf16.msra.mxu0 0
    %139 = vmatprep.subr.bf16.mxu0 0
    %140 = vmatpush1.bf16.msra.mxu0 0
    %141 = vmatprep.subr.bf16.mxu0 0
    %142 = vmatpush1.bf16.msra.mxu0 0
    %143 = vmatprep.subr.bf16.mxu0 0
    %144 = vmatpush1.bf16.msra.mxu0 0
    %145 = vmatprep.subr.bf16.mxu0 0
    %146 = vmatpush1.bf16.msra.mxu0 0
    %147 = vmatprep.subr.bf16.mxu0 0
    %148 = vmatpush1.bf16.msra.mxu0 0
    %149 = vmatprep.subr.bf16.mxu0 0
    %150 = vmatpush1.bf16.msra.mxu0 0
    %151 = vmatprep.mubr.bf16.mxu0 0
    %152 = vmatmul.mubr.bf16.gmra.mrb[0].mxu0 %v117
    %v153 = vpop.f32.mrb[0].mxu0
    %v154 = vadd.f32 %v101, %v153
    %v155 = vpop.f32.mrb[0].mxu0
    %v156 = vpop.f32.mrb[0].mxu0
    %v157 = vadd.f32 %v101, %v156
    %v158 = vpop.f32.mrb[0].mxu0
    %159 = vdwg.mxu0
    %v160 = vld [vmem:[#allocation8] sm:$0xf]
    %v161 = vld [vmem:[#allocation8 + $0x4] sm:$0xf]
    %v162 = vld [vmem:[#allocation8 + $0x8] sm:$0xf]
    %v163 = vld [vmem:[#allocation8 + $0xc] sm:$0xf]
    %v164 = vld [vmem:[%s5] sm:$0x1]
    %v166 = vlaneseq
    %v167 = vshrl.u32 %v166, 7
    %v168 = vsub.s32 0, %v167
    %v169 = vrot.slane %v164, %v168
    %v175 = vunpack.c.l.b16 %v160
    %v176 = vunpack.c.l.b16 %v161
    %v177 = vunpack.c.l.b16 %v162
    %v178 = vunpack.c.l.b16 %v163
    %v179 = vpack.c.b16 %v176, %v175
    %v180 = vpack.c.b16 %v178, %v177
    %v184 = vsel %vm115, %v91, 0
    %186 = vmatprep.subr.bf16.mxu0 0
    %187 = vmatpush1.bf16.msra.mxu0 %v179
    %188 = vmatprep.subr.bf16.mxu0 0
    %189 = vmatpush1.bf16.msra.mxu0 %v180
    %190 = vmatprep.subr.bf16.mxu0 0
    %191 = vmatpush1.bf16.msra.mxu0 0
    %192 = vmatprep.subr.bf16.mxu0 0
    %193 = vmatpush1.bf16.msra.mxu0 0
    %194 = vmatprep.subr.bf16.mxu0 0
    %195 = vmatpush1.bf16.msra.mxu0 0
    %196 = vmatprep.subr.bf16.mxu0 0
    %197 = vmatpush1.bf16.msra.mxu0 0
    %198 = vmatprep.subr.bf16.mxu0 0
    %199 = vmatpush1.bf16.msra.mxu0 0
    %200 = vmatprep.subr.bf16.mxu0 0
    %201 = vmatpush1.bf16.msra.mxu0 0
    %202 = vmatprep.subr.bf16.mxu0 0
    %203 = vmatpush1.bf16.msra.mxu0 0
    %204 = vmatprep.subr.bf16.mxu0 0
    %205 = vmatpush1.bf16.msra.mxu0 0
    %206 = vmatprep.subr.bf16.mxu0 0
    %207 = vmatpush1.bf16.msra.mxu0 0
    %208 = vmatprep.subr.bf16.mxu0 0
    %209 = vmatpush1.bf16.msra.mxu0 0
    %210 = vmatprep.subr.bf16.mxu0 0
    %211 = vmatpush1.bf16.msra.mxu0 0
    %212 = vmatprep.subr.bf16.mxu0 0
    %213 = vmatpush1.bf16.msra.mxu0 0
    %214 = vmatprep.subr.bf16.mxu0 0
    %215 = vmatpush1.bf16.msra.mxu0 0
    %216 = vmatprep.subr.bf16.mxu0 0
    %217 = vmatpush1.bf16.msra.mxu0 0
    %218 = vmatprep.mubr.bf16.mxu0 0
    %219 = vmatmul.mubr.bf16.gmra.mrb[0].mxu0 %v184
    %v220 = vpop.f32.mrb[0].mxu0
    %v221 = vadd.f32 %v169, %v220
    %v222 = vpop.f32.mrb[0].mxu0
    %v223 = vpop.f32.mrb[0].mxu0
    %v224 = vadd.f32 %v169, %v223
    %v225 = vpop.f32.mrb[0].mxu0
    %226 = vdwg.mxu0
    %v227 = vpack.c.bf16 %v154, %v154
    %v228 = vpack.c.bf16 %v157, %v157
    %v229 = vpack.c.bf16 %v221, %v221
    %v230 = vpack.c.bf16 %v224, %v224
    %vm231 = vcmask 64512
    %v233 = vsel %vm231, %v227, 0
    %v236 = vsel %vm231, %v229, 0
    %238 = vmatprep.subr.bf16.mxu0 0
    %239 = vmatpush1.bf16.xpose.msra.mxu0 %v236
    %240 = vmatprep.subr.bf16.mxu0 0
    %241 = vmatpush1.bf16.xpose.msra.mxu0 0
    %242 = vmatprep.subr.bf16.mxu0 0
    %243 = vmatpush1.bf16.xpose.msra.mxu0 0
    %244 = vmatprep.subr.bf16.mxu0 0
    %245 = vmatpush1.bf16.xpose.msra.mxu0 0
    %246 = vmatprep.subr.bf16.mxu0 0
    %247 = vmatpush1.bf16.xpose.msra.mxu0 0
    %248 = vmatprep.subr.bf16.mxu0 0
    %249 = vmatpush1.bf16.xpose.msra.mxu0 0
    %250 = vmatprep.subr.bf16.mxu0 0
    %251 = vmatpush1.bf16.xpose.msra.mxu0 0
    %252 = vmatprep.subr.bf16.mxu0 0
    %253 = vmatpush1.bf16.xpose.msra.mxu0 0
    %254 = vmatprep.subr.bf16.mxu0 0
    %255 = vmatpush1.bf16.xpose.msra.mxu0 0
    %256 = vmatprep.subr.bf16.mxu0 0
    %257 = vmatpush1.bf16.xpose.msra.mxu0 0
    %258 = vmatprep.subr.bf16.mxu0 0
    %259 = vmatpush1.bf16.xpose.msra.mxu0 0
    %260 = vmatprep.subr.bf16.mxu0 0
    %261 = vmatpush1.bf16.xpose.msra.mxu0 0
    %262 = vmatprep.subr.bf16.mxu0 0
    %263 = vmatpush1.bf16.xpose.msra.mxu0 0
    %264 = vmatprep.subr.bf16.mxu0 0
    %265 = vmatpush1.bf16.xpose.msra.mxu0 0
    %266 = vmatprep.subr.bf16.mxu0 0
    %267 = vmatpush1.bf16.xpose.msra.mxu0 0
    %268 = vmatprep.subr.bf16.mxu0 0
    %269 = vmatpush1.bf16.xpose.msra.mxu0 0
    %270 = vmatprep.mubr.bf16.mxu0 0
    %271 = vmatmul.mubr.bf16.gmra.mrb[0].mxu0 %v233
    %v272 = vpop.f32.mrb[0].mxu0
    %v273 = vadd.f32 0.0, %v272
    %v274 = vpop.f32.mrb[0].mxu0
    %v275 = vpop.f32.mrb[0].mxu0
    %v276 = vpop.f32.mrb[0].mxu0
    %277 = vdwg.mxu0
    %v279 = vsel %vm231, %v228, 0
    %v282 = vsel %vm231, %v230, 0
    %284 = vmatprep.subr.bf16.mxu0 0
    %285 = vmatpush1.bf16.xpose.msra.mxu0 %v282
    %286 = vmatprep.subr.bf16.mxu0 0
    %287 = vmatpush1.bf16.xpose.msra.mxu0 0
    %288 = vmatprep.subr.bf16.mxu0 0
    %289 = vmatpush1.bf16.xpose.msra.mxu0 0
    %290 = vmatprep.subr.bf16.mxu0 0
    %291 = vmatpush1.bf16.xpose.msra.mxu0 0
    %292 = vmatprep.subr.bf16.mxu0 0
    %293 = vmatpush1.bf16.xpose.msra.mxu0 0
    %294 = vmatprep.subr.bf16.mxu0 0
    %295 = vmatpush1.bf16.xpose.msra.mxu0 0
    %296 = vmatprep.subr.bf16.mxu0 0
    %297 = vmatpush1.bf16.xpose.msra.mxu0 0
    %298 = vmatprep.subr.bf16.mxu0 0
    %299 = vmatpush1.bf16.xpose.msra.mxu0 0
    %300 = vmatprep.subr.bf16.mxu0 0
    %301 = vmatpush1.bf16.xpose.msra.mxu0 0
    %302 = vmatprep.subr.bf16.mxu0 0
    %303 = vmatpush1.bf16.xpose.msra.mxu0 0
    %304 = vmatprep.subr.bf16.mxu0 0
    %305 = vmatpush1.bf16.xpose.msra.mxu0 0
    %306 = vmatprep.subr.bf16.mxu0 0
    %307 = vmatpush1.bf16.xpose.msra.mxu0 0
    %308 = vmatprep.subr.bf16.mxu0 0
    %309 = vmatpush1.bf16.xpose.msra.mxu0 0
    %310 = vmatprep.subr.bf16.mxu0 0
    %311 = vmatpush1.bf16.xpose.msra.mxu0 0
    %312 = vmatprep.subr.bf16.mxu0 0
    %313 = vmatpush1.bf16.xpose.msra.mxu0 0
    %314 = vmatprep.subr.bf16.mxu0 0
    %315 = vmatpush1.bf16.xpose.msra.mxu0 0
    %316 = vmatprep.mubr.bf16.mxu0 0
    %317 = vmatmul.mubr.bf16.gmra.mrb[0].mxu0 %v279
    %v318 = vpop.f32.mrb[0].mxu0
    %v319 = vadd.f32 0.0, %v318
    %v320 = vpop.f32.mrb[0].mxu0
    %v321 = vpop.f32.mrb[0].mxu0
    %v322 = vpop.f32.mrb[0].mxu0
    %323 = vdwg.mxu0
    %v324 = vmul.f32 %v273, 0.35355338
    %v325 = vmul.f32 %v319, 0.35355338
    %v326 = vsel %vm231, %v324, -inf
    %327 = vmax.xlane.f32.xlu0 %v326
    %v328 = vpop.xlane.xlu0 %327
    %v329 = vsel %vm231, %v325, -inf
    %330 = vmax.xlane.f32.xlu0 %v329
    %v331 = vpop.xlane.xlu0 %330
    %v332 = vsub.f32 %v324, %v328
    %v333 = vsub.f32 %v325, %v331
    %v334 = vmul.f32 %v332, 1.442695
    %v335 = vpow.pop %v334
    %v336 = vmul.f32 %v333, 1.442695
    %v337 = vpow.pop %v336
    %v338 = vsel %vm231, %v335, 0.0
    %339 = vadd.xlane.f32.xlu0 %v338
    %v340 = vpop.xlane.xlu0 %339
    %v341 = vsel %vm231, %v337, 0.0
    %342 = vadd.xlane.f32.xlu0 %v341
    %v343 = vpop.xlane.xlu0 %342
    %v344 = vrcp.pop %v340
    %v345 = vrcp.pop %v343
    %v346 = vmul.f32 %v335, %v344
    %v347 = vmul.f32 %v337, %v345
    %v348 = vpack.c.bf16 %v346, %v346
    %v349 = vpack.c.bf16 %v347, %v347
    %351 = vrot.lane.b32.xlu0 %v229, 96
    %v352 = vpop.permute.xlu0 %351
    %v354 = vsel %vm231, %v348, 0
    %vm356 = vcmask 1043456
    %v358 = vsel %vm356, %v352, 0
    %360 = vmatprep.subr.bf16.mxu0 0
    %361 = vmatpush1.bf16.msra.mxu0 %v358
    %362 = vmatprep.subr.bf16.mxu0 0
    %363 = vmatpush1.bf16.msra.mxu0 0
    %364 = vmatprep.subr.bf16.mxu0 0
    %365 = vmatpush1.bf16.msra.mxu0 0
    %366 = vmatprep.subr.bf16.mxu0 0
    %367 = vmatpush1.bf16.msra.mxu0 0
    %368 = vmatprep.subr.bf16.mxu0 0
    %369 = vmatpush1.bf16.msra.mxu0 0
    %370 = vmatprep.subr.bf16.mxu0 0
    %371 = vmatpush1.bf16.msra.mxu0 0
    %372 = vmatprep.subr.bf16.mxu0 0
    %373 = vmatpush1.bf16.msra.mxu0 0
    %374 = vmatprep.subr.bf16.mxu0 0
    %375 = vmatpush1.bf16.msra.mxu0 0
    %376 = vmatprep.subr.bf16.mxu0 0
    %377 = vmatpush1.bf16.msra.mxu0 0
    %378 = vmatprep.subr.bf16.mxu0 0
    %379 = vmatpush1.bf16.msra.mxu0 0
    %380 = vmatprep.subr.bf16.mxu0 0
    %381 = vmatpush1.bf16.msra.mxu0 0
    %382 = vmatprep.subr.bf16.mxu0 0
    %383 = vmatpush1.bf16.msra.mxu0 0
    %384 = vmatprep.subr.bf16.mxu0 0
    %385 = vmatpush1.bf16.msra.mxu0 0
    %386 = vmatprep.subr.bf16.mxu0 0
    %387 = vmatpush1.bf16.msra.mxu0 0
    %388 = vmatprep.subr.bf16.mxu0 0
    %389 = vmatpush1.bf16.msra.mxu0 0
    %390 = vmatprep.subr.bf16.mxu0 0
    %391 = vmatpush1.bf16.msra.mxu0 0
    %392 = vmatprep.mubr.bf16.mxu0 0
    %393 = vmatmul.mubr.bf16.gmra.mrb[0].mxu0 %v354
    %v394 = vpop.f32.mrb[0].mxu0
    %v395 = vadd.f32 0.0, %v394
    %v396 = vpop.f32.mrb[0].mxu0
    %v397 = vpop.f32.mrb[0].mxu0
    %v398 = vpop.f32.mrb[0].mxu0
    %399 = vdwg.mxu0
    %401 = vrot.lane.b32.xlu0 %v230, 96
    %v402 = vpop.permute.xlu0 %401
    %v404 = vsel %vm231, %v349, 0
    %v407 = vsel %vm356, %v402, 0
    %409 = vmatprep.subr.bf16.mxu0 0
    %410 = vmatpush1.bf16.msra.mxu0 %v407
    %411 = vmatprep.subr.bf16.mxu0 0
    %412 = vmatpush1.bf16.msra.mxu0 0
    %413 = vmatprep.subr.bf16.mxu0 0
    %414 = vmatpush1.bf16.msra.mxu0 0
    %415 = vmatprep.subr.bf16.mxu0 0
    %416 = vmatpush1.bf16.msra.mxu0 0
    %417 = vmatprep.subr.bf16.mxu0 0
    %418 = vmatpush1.bf16.msra.mxu0 0
    %419 = vmatprep.subr.bf16.mxu0 0
    %420 = vmatpush1.bf16.msra.mxu0 0
    %421 = vmatprep.subr.bf16.mxu0 0
    %422 = vmatpush1.bf16.msra.mxu0 0
    %423 = vmatprep.subr.bf16.mxu0 0
    %424 = vmatpush1.bf16.msra.mxu0 0
    %425 = vmatprep.subr.bf16.mxu0 0
    %426 = vmatpush1.bf16.msra.mxu0 0
    %427 = vmatprep.subr.bf16.mxu0 0
    %428 = vmatpush1.bf16.msra.mxu0 0
    %429 = vmatprep.subr.bf16.mxu0 0
    %430 = vmatpush1.bf16.msra.mxu0 0
    %431 = vmatprep.subr.bf16.mxu0 0
    %432 = vmatpush1.bf16.msra.mxu0 0
    %433 = vmatprep.subr.bf16.mxu0 0
    %434 = vmatpush1.bf16.msra.mxu0 0
    %435 = vmatprep.subr.bf16.mxu0 0
    %436 = vmatpush1.bf16.msra.mxu0 0
    %437 = vmatprep.subr.bf16.mxu0 0
    %438 = vmatpush1.bf16.msra.mxu0 0
    %439 = vmatprep.subr.bf16.mxu0 0
    %440 = vmatpush1.bf16.msra.mxu0 0
    %441 = vmatprep.mubr.bf16.mxu0 0
    %442 = vmatmul.mubr.bf16.gmra.mrb[0].mxu0 %v404
    %v443 = vpop.f32.mrb[0].mxu0
    %v444 = vadd.f32 0.0, %v443
    %v445 = vpop.f32.mrb[0].mxu0
    %v446 = vpop.f32.mrb[0].mxu0
    %v447 = vpop.f32.mrb[0].mxu0
    %448 = vdwg.mxu0
    %v449 = vpack.c.bf16 %v444, %v395
    %v450 = vld [vmem:[%s6] sm:$0xf]
    %452 = vrot.lane.b32.xlu0 %v227, 120
    %v453 = vpop.permute.xlu0 %452
    %454 = vrot.lane.b32.xlu0 %v229, 120
    %v455 = vpop.permute.xlu0 %454
    %v457 = vsel %vm231, %v453, 0
    %v460 = vsel %vm231, %v455, 0
    %462 = vmatprep.subr.bf16.mxu0 0
    %463 = vmatpush1.bf16.xpose.msra.mxu0 %v460
    %464 = vmatprep.subr.bf16.mxu0 0
    %465 = vmatpush1.bf16.xpose.msra.mxu0 0
    %466 = vmatprep.subr.bf16.mxu0 0
    %467 = vmatpush1.bf16.xpose.msra.mxu0 0
    %468 = vmatprep.subr.bf16.mxu0 0
    %469 = vmatpush1.bf16.xpose.msra.mxu0 0
    %470 = vmatprep.subr.bf16.mxu0 0
    %471 = vmatpush1.bf16.xpose.msra.mxu0 0
    %472 = vmatprep.subr.bf16.mxu0 0
    %473 = vmatpush1.bf16.xpose.msra.mxu0 0
    %474 = vmatprep.subr.bf16.mxu0 0
    %475 = vmatpush1.bf16.xpose.msra.mxu0 0
    %476 = vmatprep.subr.bf16.mxu0 0
    %477 = vmatpush1.bf16.xpose.msra.mxu0 0
    %478 = vmatprep.subr.bf16.mxu0 0
    %479 = vmatpush1.bf16.xpose.msra.mxu0 0
    %480 = vmatprep.subr.bf16.mxu0 0
    %481 = vmatpush1.bf16.xpose.msra.mxu0 0
    %482 = vmatprep.subr.bf16.mxu0 0
    %483 = vmatpush1.bf16.xpose.msra.mxu0 0
    %484 = vmatprep.subr.bf16.mxu0 0
    %485 = vmatpush1.bf16.xpose.msra.mxu0 0
    %486 = vmatprep.subr.bf16.mxu0 0
    %487 = vmatpush1.bf16.xpose.msra.mxu0 0
    %488 = vmatprep.subr.bf16.mxu0 0
    %489 = vmatpush1.bf16.xpose.msra.mxu0 0
    %490 = vmatprep.subr.bf16.mxu0 0
    %491 = vmatpush1.bf16.xpose.msra.mxu0 0
    %492 = vmatprep.subr.bf16.mxu0 0
    %493 = vmatpush1.bf16.xpose.msra.mxu0 0
    %494 = vmatprep.mubr.bf16.mxu0 0
    %495 = vmatmul.mubr.bf16.gmra.mrb[0].mxu0 %v457
    %v496 = vpop.f32.mrb[0].mxu0
    %v497 = vadd.f32 0.0, %v496
    %v498 = vpop.f32.mrb[0].mxu0
    %v499 = vpop.f32.mrb[0].mxu0
    %v500 = vpop.f32.mrb[0].mxu0
    %501 = vdwg.mxu0
    %503 = vrot.lane.b32.xlu0 %v228, 120
    %v504 = vpop.permute.xlu0 %503
    %505 = vrot.lane.b32.xlu0 %v230, 120
    %v506 = vpop.permute.xlu0 %505
    %v508 = vsel %vm231, %v504, 0
    %v511 = vsel %vm231, %v506, 0
    %513 = vmatprep.subr.bf16.mxu0 0
    %514 = vmatpush1.bf16.xpose.msra.mxu0 %v511
    %515 = vmatprep.subr.bf16.mxu0 0
    %516 = vmatpush1.bf16.xpose.msra.mxu0 0
    %517 = vmatprep.subr.bf16.mxu0 0
    %518 = vmatpush1.bf16.xpose.msra.mxu0 0
    %519 = vmatprep.subr.bf16.mxu0 0
    %520 = vmatpush1.bf16.xpose.msra.mxu0 0
    %521 = vmatprep.subr.bf16.mxu0 0
    %522 = vmatpush1.bf16.xpose.msra.mxu0 0
    %523 = vmatprep.subr.bf16.mxu0 0
    %524 = vmatpush1.bf16.xpose.msra.mxu0 0
    %525 = vmatprep.subr.bf16.mxu0 0
    %526 = vmatpush1.bf16.xpose.msra.mxu0 0
    %527 = vmatprep.subr.bf16.mxu0 0
    %528 = vmatpush1.bf16.xpose.msra.mxu0 0
    %529 = vmatprep.subr.bf16.mxu0 0
    %530 = vmatpush1.bf16.xpose.msra.mxu0 0
    %531 = vmatprep.subr.bf16.mxu0 0
    %532 = vmatpush1.bf16.xpose.msra.mxu0 0
    %533 = vmatprep.subr.bf16.mxu0 0
    %534 = vmatpush1.bf16.xpose.msra.mxu0 0
    %535 = vmatprep.subr.bf16.mxu0 0
    %536 = vmatpush1.bf16.xpose.msra.mxu0 0
    %537 = vmatprep.subr.bf16.mxu0 0
    %538 = vmatpush1.bf16.xpose.msra.mxu0 0
    %539 = vmatprep.subr.bf16.mxu0 0
    %540 = vmatpush1.bf16.xpose.msra.mxu0 0
    %541 = vmatprep.subr.bf16.mxu0 0
    %542 = vmatpush1.bf16.xpose.msra.mxu0 0
    %543 = vmatprep.subr.bf16.mxu0 0
    %544 = vmatpush1.bf16.xpose.msra.mxu0 0
    %545 = vmatprep.mubr.bf16.mxu0 0
    %546 = vmatmul.mubr.bf16.gmra.mrb[0].mxu0 %v508
    %v547 = vpop.f32.mrb[0].mxu0
    %v548 = vadd.f32 0.0, %v547
    %v549 = vpop.f32.mrb[0].mxu0
    %v550 = vpop.f32.mrb[0].mxu0
    %v551 = vpop.f32.mrb[0].mxu0
    %552 = vdwg.mxu0
    %v553 = vmul.f32 %v497, 0.35355338
    %v554 = vmul.f32 %v548, 0.35355338
    %v555 = vsel %vm231, %v553, -inf
    %556 = vmax.xlane.f32.xlu0 %v555
    %v557 = vpop.xlane.xlu0 %556
    %v558 = vsel %vm231, %v554, -inf
    %559 = vmax.xlane.f32.xlu0 %v558
    %v560 = vpop.xlane.xlu0 %559
    %v561 = vsub.f32 %v553, %v557
    %v562 = vsub.f32 %v554, %v560
    %v563 = vmul.f32 %v561, 1.442695
    %v564 = vpow.pop %v563
    %v565 = vmul.f32 %v562, 1.442695
    %v566 = vpow.pop %v565
    %v567 = vsel %vm231, %v564, 0.0
    %568 = vadd.xlane.f32.xlu0 %v567
    %v569 = vpop.xlane.xlu0 %568
    %v570 = vsel %vm231, %v566, 0.0
    %571 = vadd.xlane.f32.xlu0 %v570
    %v572 = vpop.xlane.xlu0 %571
    %v573 = vrcp.pop %v569
    %v574 = vrcp.pop %v572
    %v575 = vmul.f32 %v564, %v573
    %v576 = vmul.f32 %v566, %v574
    %v577 = vpack.c.bf16 %v575, %v575
    %v578 = vpack.c.bf16 %v576, %v576
    %579 = vrot.lane.b32.xlu0 %v229, 88
    %v580 = vpop.permute.xlu0 %579
    %v582 = vsel %vm231, %v577, 0
    %v585 = vsel %vm356, %v580, 0
    %587 = vmatprep.subr.bf16.mxu0 0
    %588 = vmatpush1.bf16.msra.mxu0 %v585
    %589 = vmatprep.subr.bf16.mxu0 0
    %590 = vmatpush1.bf16.msra.mxu0 0
    %591 = vmatprep.subr.bf16.mxu0 0
    %592 = vmatpush1.bf16.msra.mxu0 0
    %593 = vmatprep.subr.bf16.mxu0 0
    %594 = vmatpush1.bf16.msra.mxu0 0
    %595 = vmatprep.subr.bf16.mxu0 0
    %596 = vmatpush1.bf16.msra.mxu0 0
    %597 = vmatprep.subr.bf16.mxu0 0
    %598 = vmatpush1.bf16.msra.mxu0 0
    %599 = vmatprep.subr.bf16.mxu0 0
    %600 = vmatpush1.bf16.msra.mxu0 0
    %601 = vmatprep.subr.bf16.mxu0 0
    %602 = vmatpush1.bf16.msra.mxu0 0
    %603 = vmatprep.subr.bf16.mxu0 0
    %604 = vmatpush1.bf16.msra.mxu0 0
    %605 = vmatprep.subr.bf16.mxu0 0
    %606 = vmatpush1.bf16.msra.mxu0 0
    %607 = vmatprep.subr.bf16.mxu0 0
    %608 = vmatpush1.bf16.msra.mxu0 0
    %609 = vmatprep.subr.bf16.mxu0 0
    %610 = vmatpush1.bf16.msra.mxu0 0
    %611 = vmatprep.subr.bf16.mxu0 0
    %612 = vmatpush1.bf16.msra.mxu0 0
    %613 = vmatprep.subr.bf16.mxu0 0
    %614 = vmatpush1.bf16.msra.mxu0 0
    %615 = vmatprep.subr.bf16.mxu0 0
    %616 = vmatpush1.bf16.msra.mxu0 0
    %617 = vmatprep.subr.bf16.mxu0 0
    %618 = vmatpush1.bf16.msra.mxu0 0
    %619 = vmatprep.mubr.bf16.mxu0 0
    %620 = vmatmul.mubr.bf16.gmra.mrb[0].mxu0 %v582
    %v621 = vpop.f32.mrb[0].mxu0
    %v622 = vadd.f32 0.0, %v621
    %v623 = vpop.f32.mrb[0].mxu0
    %v624 = vpop.f32.mrb[0].mxu0
    %v625 = vpop.f32.mrb[0].mxu0
    %626 = vdwg.mxu0
    %627 = vrot.lane.b32.xlu0 %v230, 88
    %v628 = vpop.permute.xlu0 %627
    %v630 = vsel %vm231, %v578, 0
    %v633 = vsel %vm356, %v628, 0
    %635 = vmatprep.subr.bf16.mxu0 0
    %636 = vmatpush1.bf16.msra.mxu0 %v633
    %637 = vmatprep.subr.bf16.mxu0 0
    %638 = vmatpush1.bf16.msra.mxu0 0
    %639 = vmatprep.subr.bf16.mxu0 0
    %640 = vmatpush1.bf16.msra.mxu0 0
    %641 = vmatprep.subr.bf16.mxu0 0
    %642 = vmatpush1.bf16.msra.mxu0 0
    %643 = vmatprep.subr.bf16.mxu0 0
    %644 = vmatpush1.bf16.msra.mxu0 0
    %645 = vmatprep.subr.bf16.mxu0 0
    %646 = vmatpush1.bf16.msra.mxu0 0
    %647 = vmatprep.subr.bf16.mxu0 0
    %648 = vmatpush1.bf16.msra.mxu0 0
    %649 = vmatprep.subr.bf16.mxu0 0
    %650 = vmatpush1.bf16.msra.mxu0 0
    %651 = vmatprep.subr.bf16.mxu0 0
    %652 = vmatpush1.bf16.msra.mxu0 0
    %653 = vmatprep.subr.bf16.mxu0 0
    %654 = vmatpush1.bf16.msra.mxu0 0
    %655 = vmatprep.subr.bf16.mxu0 0
    %656 = vmatpush1.bf16.msra.mxu0 0
    %657 = vmatprep.subr.bf16.mxu0 0
    %658 = vmatpush1.bf16.msra.mxu0 0
    %659 = vmatprep.subr.bf16.mxu0 0
    %660 = vmatpush1.bf16.msra.mxu0 0
    %661 = vmatprep.subr.bf16.mxu0 0
    %662 = vmatpush1.bf16.msra.mxu0 0
    %663 = vmatprep.subr.bf16.mxu0 0
    %664 = vmatpush1.bf16.msra.mxu0 0
    %665 = vmatprep.subr.bf16.mxu0 0
    %666 = vmatpush1.bf16.msra.mxu0 0
    %667 = vmatprep.mubr.bf16.mxu0 0
    %668 = vmatmul.mubr.bf16.gmra.mrb[0].mxu0 %v630
    %v669 = vpop.f32.mrb[0].mxu0
    %v670 = vadd.f32 0.0, %v669
    %v671 = vpop.f32.mrb[0].mxu0
    %v672 = vpop.f32.mrb[0].mxu0
    %v673 = vpop.f32.mrb[0].mxu0
    %674 = vdwg.mxu0
    %v675 = vpack.c.bf16 %v670, %v622
    %v676 = vld [vmem:[%s6 + $0x4] sm:$0xf]
    %v678 = vsel %vm231, %v675, 0
    %v681 = vsel %vm356, %v676, 0
    %683 = vmatprep.subr.bf16.mxu0 0
    %684 = vmatpush1.bf16.msra.mxu0 %v681
    %685 = vmatprep.subr.bf16.mxu0 0
    %686 = vmatpush1.bf16.msra.mxu0 0
    %687 = vmatprep.subr.bf16.mxu0 0
    %688 = vmatpush1.bf16.msra.mxu0 0
    %689 = vmatprep.subr.bf16.mxu0 0
    %690 = vmatpush1.bf16.msra.mxu0 0
    %691 = vmatprep.subr.bf16.mxu0 0
    %692 = vmatpush1.bf16.msra.mxu0 0
    %693 = vmatprep.subr.bf16.mxu0 0
    %694 = vmatpush1.bf16.msra.mxu0 0
    %695 = vmatprep.subr.bf16.mxu0 0
    %696 = vmatpush1.bf16.msra.mxu0 0
    %697 = vmatprep.subr.bf16.mxu0 0
    %698 = vmatpush1.bf16.msra.mxu0 0
    %699 = vmatprep.subr.bf16.mxu0 0
    %700 = vmatpush1.bf16.msra.mxu0 0
    %701 = vmatprep.subr.bf16.mxu0 0
    %702 = vmatpush1.bf16.msra.mxu0 0
    %703 = vmatprep.subr.bf16.mxu0 0
    %704 = vmatpush1.bf16.msra.mxu0 0
    %705 = vmatprep.subr.bf16.mxu0 0
    %706 = vmatpush1.bf16.msra.mxu0 0
    %707 = vmatprep.subr.bf16.mxu0 0
    %708 = vmatpush1.bf16.msra.mxu0 0
    %709 = vmatprep.subr.bf16.mxu0 0
    %710 = vmatpush1.bf16.msra.mxu0 0
    %711 = vmatprep.subr.bf16.mxu0 0
    %712 = vmatpush1.bf16.msra.mxu0 0
    %713 = vmatprep.subr.bf16.mxu0 0
    %714 = vmatpush1.bf16.msra.mxu0 0
    %715 = vmatprep.mubr.bf16.mxu0 0
    %716 = vmatmul.mubr.bf16.gmra.mrb[0].mxu0 %v678
    %v717 = vpop.f32.mrb[0].mxu0
    %v718 = vadd.f32 0.0, %v717
    %v719 = vpop.f32.mrb[0].mxu0
    %v720 = vpop.f32.mrb[0].mxu0
    %v721 = vadd.f32 0.0, %v720
    %v722 = vpop.f32.mrb[0].mxu0
    %723 = vdwg.mxu0
    %v725 = vsel %vm231, %v449, 0
    %v728 = vsel %vm356, %v450, 0
    %730 = vmatprep.subr.bf16.mxu0 0
    %731 = vmatpush1.bf16.msra.mxu0 %v728
    %732 = vmatprep.subr.bf16.mxu0 0
    %733 = vmatpush1.bf16.msra.mxu0 0
    %734 = vmatprep.subr.bf16.mxu0 0
    %735 = vmatpush1.bf16.msra.mxu0 0
    %736 = vmatprep.subr.bf16.mxu0 0
    %737 = vmatpush1.bf16.msra.mxu0 0
    %738 = vmatprep.subr.bf16.mxu0 0
    %739 = vmatpush1.bf16.msra.mxu0 0
    %740 = vmatprep.subr.bf16.mxu0 0
    %741 = vmatpush1.bf16.msra.mxu0 0
    %742 = vmatprep.subr.bf16.mxu0 0
    %743 = vmatpush1.bf16.msra.mxu0 0
    %744 = vmatprep.subr.bf16.mxu0 0
    %745 = vmatpush1.bf16.msra.mxu0 0
    %746 = vmatprep.subr.bf16.mxu0 0
    %747 = vmatpush1.bf16.msra.mxu0 0
    %748 = vmatprep.subr.bf16.mxu0 0
    %749 = vmatpush1.bf16.msra.mxu0 0
    %750 = vmatprep.subr.bf16.mxu0 0
    %751 = vmatpush1.bf16.msra.mxu0 0
    %752 = vmatprep.subr.bf16.mxu0 0
    %753 = vmatpush1.bf16.msra.mxu0 0
    %754 = vmatprep.subr.bf16.mxu0 0
    %755 = vmatpush1.bf16.msra.mxu0 0
    %756 = vmatprep.subr.bf16.mxu0 0
    %757 = vmatpush1.bf16.msra.mxu0 0
    %758 = vmatprep.subr.bf16.mxu0 0
    %759 = vmatpush1.bf16.msra.mxu0 0
    %760 = vmatprep.subr.bf16.mxu0 0
    %761 = vmatpush1.bf16.msra.mxu0 0
    %762 = vmatprep.mubr.bf16.mxu0 0
    %763 = vmatmul.mubr.bf16.gmra.mrb[0].mxu0 %v725
    %v764 = vpop.f32.mrb[0].mxu0
    %v765 = vadd.f32 %v718, %v764
    %v766 = vpop.f32.mrb[0].mxu0
    %v767 = vpop.f32.mrb[0].mxu0
    %v768 = vadd.f32 %v721, %v767
    %v769 = vpop.f32.mrb[0].mxu0
    %770 = vdwg.mxu0
    %771 = vrot.lane.b32.xlu0 %v227, 112
    %v772 = vpop.permute.xlu0 %771
    %773 = vrot.lane.b32.xlu0 %v229, 112
    %v774 = vpop.permute.xlu0 %773
    %v776 = vsel %vm231, %v772, 0
    %v779 = vsel %vm231, %v774, 0
    %781 = vmatprep.subr.bf16.mxu0 0
    %782 = vmatpush1.bf16.xpose.msra.mxu0 %v779
    %783 = vmatprep.subr.bf16.mxu0 0
    %784 = vmatpush1.bf16.xpose.msra.mxu0 0
    %785 = vmatprep.subr.bf16.mxu0 0
    %786 = vmatpush1.bf16.xpose.msra.mxu0 0
    %787 = vmatprep.subr.bf16.mxu0 0
    %788 = vmatpush1.bf16.xpose.msra.mxu0 0
    %789 = vmatprep.subr.bf16.mxu0 0
    %790 = vmatpush1.bf16.xpose.msra.mxu0 0
    %791 = vmatprep.subr.bf16.mxu0 0
    %792 = vmatpush1.bf16.xpose.msra.mxu0 0
    %793 = vmatprep.subr.bf16.mxu0 0
    %794 = vmatpush1.bf16.xpose.msra.mxu0 0
    %795 = vmatprep.subr.bf16.mxu0 0
    %796 = vmatpush1.bf16.xpose.msra.mxu0 0
    %797 = vmatprep.subr.bf16.mxu0 0
    %798 = vmatpush1.bf16.xpose.msra.mxu0 0
    %799 = vmatprep.subr.bf16.mxu0 0
    %800 = vmatpush1.bf16.xpose.msra.mxu0 0
    %801 = vmatprep.subr.bf16.mxu0 0
    %802 = vmatpush1.bf16.xpose.msra.mxu0 0
    %803 = vmatprep.subr.bf16.mxu0 0
    %804 = vmatpush1.bf16.xpose.msra.mxu0 0
    %805 = vmatprep.subr.bf16.mxu0 0
    %806 = vmatpush1.bf16.xpose.msra.mxu0 0
    %807 = vmatprep.subr.bf16.mxu0 0
    %808 = vmatpush1.bf16.xpose.msra.mxu0 0
    %809 = vmatprep.subr.bf16.mxu0 0
    %810 = vmatpush1.bf16.xpose.msra.mxu0 0
    %811 = vmatprep.subr.bf16.mxu0 0
    %812 = vmatpush1.bf16.xpose.msra.mxu0 0
    %813 = vmatprep.mubr.bf16.mxu0 0
    %814 = vmatmul.mubr.bf16.gmra.mrb[0].mxu0 %v776
    %v815 = vpop.f32.mrb[0].mxu0
    %v816 = vadd.f32 0.0, %v815
    %v817 = vpop.f32.mrb[0].mxu0
    %v818 = vpop.f32.mrb[0].mxu0
    %v819 = vpop.f32.mrb[0].mxu0
    %820 = vdwg.mxu0
    %821 = vrot.lane.b32.xlu0 %v228, 112
    %v822 = vpop.permute.xlu0 %821
    %823 = vrot.lane.b32.xlu0 %v230, 112
    %v824 = vpop.permute.xlu0 %823
    %v826 = vsel %vm231, %v822, 0
    %v829 = vsel %vm231, %v824, 0
    %831 = vmatprep.subr.bf16.mxu0 0
    %832 = vmatpush1.bf16.xpose.msra.mxu0 %v829
    %833 = vmatprep.subr.bf16.mxu0 0
    %834 = vmatpush1.bf16.xpose.msra.mxu0 0
    %835 = vmatprep.subr.bf16.mxu0 0
    %836 = vmatpush1.bf16.xpose.msra.mxu0 0
    %837 = vmatprep.subr.bf16.mxu0 0
    %838 = vmatpush1.bf16.xpose.msra.mxu0 0
    %839 = vmatprep.subr.bf16.mxu0 0
    %840 = vmatpush1.bf16.xpose.msra.mxu0 0
    %841 = vmatprep.subr.bf16.mxu0 0
    %842 = vmatpush1.bf16.xpose.msra.mxu0 0
    %843 = vmatprep.subr.bf16.mxu0 0
    %844 = vmatpush1.bf16.xpose.msra.mxu0 0
    %845 = vmatprep.subr.bf16.mxu0 0
    %846 = vmatpush1.bf16.xpose.msra.mxu0 0
    %847 = vmatprep.subr.bf16.mxu0 0
    %848 = vmatpush1.bf16.xpose.msra.mxu0 0
    %849 = vmatprep.subr.bf16.mxu0 0
    %850 = vmatpush1.bf16.xpose.msra.mxu0 0
    %851 = vmatprep.subr.bf16.mxu0 0
    %852 = vmatpush1.bf16.xpose.msra.mxu0 0
    %853 = vmatprep.subr.bf16.mxu0 0
    %854 = vmatpush1.bf16.xpose.msra.mxu0 0
    %855 = vmatprep.subr.bf16.mxu0 0
    %856 = vmatpush1.bf16.xpose.msra.mxu0 0
    %857 = vmatprep.subr.bf16.mxu0 0
    %858 = vmatpush1.bf16.xpose.msra.mxu0 0
    %859 = vmatprep.subr.bf16.mxu0 0
    %860 = vmatpush1.bf16.xpose.msra.mxu0 0
    %861 = vmatprep.subr.bf16.mxu0 0
    %862 = vmatpush1.bf16.xpose.msra.mxu0 0
    %863 = vmatprep.mubr.bf16.mxu0 0
    %864 = vmatmul.mubr.bf16.gmra.mrb[0].mxu0 %v826
    %v865 = vpop.f32.mrb[0].mxu0
    %v866 = vadd.f32 0.0, %v865
    %v867 = vpop.f32.mrb[0].mxu0
    %v868 = vpop.f32.mrb[0].mxu0
    %v869 = vpop.f32.mrb[0].mxu0
    %870 = vdwg.mxu0
    %v871 = vmul.f32 %v816, 0.35355338
    %v872 = vmul.f32 %v866, 0.35355338
    %v873 = vsel %vm231, %v871, -inf
    %874 = vmax.xlane.f32.xlu0 %v873
    %v875 = vpop.xlane.xlu0 %874
    %v876 = vsel %vm231, %v872, -inf
    %877 = vmax.xlane.f32.xlu0 %v876
    %v878 = vpop.xlane.xlu0 %877
    %v879 = vsub.f32 %v871, %v875
    %v880 = vsub.f32 %v872, %v878
    %v881 = vmul.f32 %v879, 1.442695
    %v882 = vpow.pop %v881
    %v883 = vmul.f32 %v880, 1.442695
    %v884 = vpow.pop %v883
    %v885 = vsel %vm231, %v882, 0.0
    %886 = vadd.xlane.f32.xlu0 %v885
    %v887 = vpop.xlane.xlu0 %886
    %v888 = vsel %vm231, %v884, 0.0
    %889 = vadd.xlane.f32.xlu0 %v888
    %v890 = vpop.xlane.xlu0 %889
    %v891 = vrcp.pop %v887
    %v892 = vrcp.pop %v890
    %v893 = vmul.f32 %v882, %v891
    %v894 = vmul.f32 %v884, %v892
    %v895 = vpack.c.bf16 %v893, %v893
    %v896 = vpack.c.bf16 %v894, %v894
    %897 = vrot.lane.b32.xlu0 %v229, 80
    %v898 = vpop.permute.xlu0 %897
    %v900 = vsel %vm231, %v895, 0
    %v903 = vsel %vm356, %v898, 0
    %905 = vmatprep.subr.bf16.mxu0 0
    %906 = vmatpush1.bf16.msra.mxu0 %v903
    %907 = vmatprep.subr.bf16.mxu0 0
    %908 = vmatpush1.bf16.msra.mxu0 0
    %909 = vmatprep.subr.bf16.mxu0 0
    %910 = vmatpush1.bf16.msra.mxu0 0
    %911 = vmatprep.subr.bf16.mxu0 0
    %912 = vmatpush1.bf16.msra.mxu0 0
    %913 = vmatprep.subr.bf16.mxu0 0
    %914 = vmatpush1.bf16.msra.mxu0 0
    %915 = vmatprep.subr.bf16.mxu0 0
    %916 = vmatpush1.bf16.msra.mxu0 0
    %917 = vmatprep.subr.bf16.mxu0 0
    %918 = vmatpush1.bf16.msra.mxu0 0
    %919 = vmatprep.subr.bf16.mxu0 0
    %920 = vmatpush1.bf16.msra.mxu0 0
    %921 = vmatprep.subr.bf16.mxu0 0
    %922 = vmatpush1.bf16.msra.mxu0 0
    %923 = vmatprep.subr.bf16.mxu0 0
    %924 = vmatpush1.bf16.msra.mxu0 0
    %925 = vmatprep.subr.bf16.mxu0 0
    %926 = vmatpush1.bf16.msra.mxu0 0
    %927 = vmatprep.subr.bf16.mxu0 0
    %928 = vmatpush1.bf16.msra.mxu0 0
    %929 = vmatprep.subr.bf16.mxu0 0
    %930 = vmatpush1.bf16.msra.mxu0 0
    %931 = vmatprep.subr.bf16.mxu0 0
    %932 = vmatpush1.bf16.msra.mxu0 0
    %933 = vmatprep.subr.bf16.mxu0 0
    %934 = vmatpush1.bf16.msra.mxu0 0
    %935 = vmatprep.subr.bf16.mxu0 0
    %936 = vmatpush1.bf16.msra.mxu0 0
    %937 = vmatprep.mubr.bf16.mxu0 0
    %938 = vmatmul.mubr.bf16.gmra.mrb[0].mxu0 %v900
    %v939 = vpop.f32.mrb[0].mxu0
    %v940 = vadd.f32 0.0, %v939
    %v941 = vpop.f32.mrb[0].mxu0
    %v942 = vpop.f32.mrb[0].mxu0
    %v943 = vpop.f32.mrb[0].mxu0
    %944 = vdwg.mxu0
    %945 = vrot.lane.b32.xlu0 %v230, 80
    %v946 = vpop.permute.xlu0 %945
    %v948 = vsel %vm231, %v896, 0
    %v951 = vsel %vm356, %v946, 0
    %953 = vmatprep.subr.bf16.mxu0 0
    %954 = vmatpush1.bf16.msra.mxu0 %v951
    %955 = vmatprep.subr.bf16.mxu0 0
    %956 = vmatpush1.bf16.msra.mxu0 0
    %957 = vmatprep.subr.bf16.mxu0 0
    %958 = vmatpush1.bf16.msra.mxu0 0
    %959 = vmatprep.subr.bf16.mxu0 0
    %960 = vmatpush1.bf16.msra.mxu0 0
    %961 = vmatprep.subr.bf16.mxu0 0
    %962 = vmatpush1.bf16.msra.mxu0 0
    %963 = vmatprep.subr.bf16.mxu0 0
    %964 = vmatpush1.bf16.msra.mxu0 0
    %965 = vmatprep.subr.bf16.mxu0 0
    %966 = vmatpush1.bf16.msra.mxu0 0
    %967 = vmatprep.subr.bf16.mxu0 0
    %968 = vmatpush1.bf16.msra.mxu0 0
    %969 = vmatprep.subr.bf16.mxu0 0
    %970 = vmatpush1.bf16.msra.mxu0 0
    %971 = vmatprep.subr.bf16.mxu0 0
    %972 = vmatpush1.bf16.msra.mxu0 0
    %973 = vmatprep.subr.bf16.mxu0 0
    %974 = vmatpush1.bf16.msra.mxu0 0
    %975 = vmatprep.subr.bf16.mxu0 0
    %976 = vmatpush1.bf16.msra.mxu0 0
    %977 = vmatprep.subr.bf16.mxu0 0
    %978 = vmatpush1.bf16.msra.mxu0 0
    %979 = vmatprep.subr.bf16.mxu0 0
    %980 = vmatpush1.bf16.msra.mxu0 0
    %981 = vmatprep.subr.bf16.mxu0 0
    %982 = vmatpush1.bf16.msra.mxu0 0
    %983 = vmatprep.subr.bf16.mxu0 0
    %984 = vmatpush1.bf16.msra.mxu0 0
    %985 = vmatprep.mubr.bf16.mxu0 0
    %986 = vmatmul.mubr.bf16.gmra.mrb[0].mxu0 %v948
    %v987 = vpop.f32.mrb[0].mxu0
    %v988 = vadd.f32 0.0, %v987
    %v989 = vpop.f32.mrb[0].mxu0
    %v990 = vpop.f32.mrb[0].mxu0
    %v991 = vpop.f32.mrb[0].mxu0
    %992 = vdwg.mxu0
    %v993 = vpack.c.bf16 %v988, %v940
    %v994 = vld [vmem:[%s6 + $0x8] sm:$0xf]
    %v996 = vsel %vm231, %v993, 0
    %v999 = vsel %vm356, %v994, 0
    %1001 = vmatprep.subr.bf16.mxu0 0
    %1002 = vmatpush1.bf16.msra.mxu0 %v999
    %1003 = vmatprep.subr.bf16.mxu0 0
    %1004 = vmatpush1.bf16.msra.mxu0 0
    %1005 = vmatprep.subr.bf16.mxu0 0
    %1006 = vmatpush1.bf16.msra.mxu0 0
    %1007 = vmatprep.subr.bf16.mxu0 0
    %1008 = vmatpush1.bf16.msra.mxu0 0
    %1009 = vmatprep.subr.bf16.mxu0 0
    %1010 = vmatpush1.bf16.msra.mxu0 0
    %1011 = vmatprep.subr.bf16.mxu0 0
    %1012 = vmatpush1.bf16.msra.mxu0 0
    %1013 = vmatprep.subr.bf16.mxu0 0
    %1014 = vmatpush1.bf16.msra.mxu0 0
    %1015 = vmatprep.subr.bf16.mxu0 0
    %1016 = vmatpush1.bf16.msra.mxu0 0
    %1017 = vmatprep.subr.bf16.mxu0 0
    %1018 = vmatpush1.bf16.msra.mxu0 0
    %1019 = vmatprep.subr.bf16.mxu0 0
    %1020 = vmatpush1.bf16.msra.mxu0 0
    %1021 = vmatprep.subr.bf16.mxu0 0
    %1022 = vmatpush1.bf16.msra.mxu0 0
    %1023 = vmatprep.subr.bf16.mxu0 0
    %1024 = vmatpush1.bf16.msra.mxu0 0
    %1025 = vmatprep.subr.bf16.mxu0 0
    %1026 = vmatpush1.bf16.msra.mxu0 0
    %1027 = vmatprep.subr.bf16.mxu0 0
    %1028 = vmatpush1.bf16.msra.mxu0 0
    %1029 = vmatprep.subr.bf16.mxu0 0
    %1030 = vmatpush1.bf16.msra.mxu0 0
    %1031 = vmatprep.subr.bf16.mxu0 0
    %1032 = vmatpush1.bf16.msra.mxu0 0
    %1033 = vmatprep.mubr.bf16.mxu0 0
    %1034 = vmatmul.mubr.bf16.gmra.mrb[0].mxu0 %v996
    %v1035 = vpop.f32.mrb[0].mxu0
    %v1036 = vadd.f32 0.0, %v1035
    %v1037 = vpop.f32.mrb[0].mxu0
    %v1038 = vpop.f32.mrb[0].mxu0
    %v1039 = vadd.f32 0.0, %v1038
    %v1040 = vpop.f32.mrb[0].mxu0
    %1041 = vdwg.mxu0
    %v1042 = vadd.f32 %v765, %v1036
    %v1043 = vadd.f32 %v768, %v1039
    %1044 = vrot.lane.b32.xlu0 %v227, 104
    %v1045 = vpop.permute.xlu0 %1044
    %1046 = vrot.lane.b32.xlu0 %v229, 104
    %v1047 = vpop.permute.xlu0 %1046
    %v1049 = vsel %vm231, %v1045, 0
    %v1052 = vsel %vm231, %v1047, 0
    %1054 = vmatprep.subr.bf16.mxu0 0
    %1055 = vmatpush1.bf16.xpose.msra.mxu0 %v1052
    %1056 = vmatprep.subr.bf16.mxu0 0
    %1057 = vmatpush1.bf16.xpose.msra.mxu0 0
    %1058 = vmatprep.subr.bf16.mxu0 0
    %1059 = vmatpush1.bf16.xpose.msra.mxu0 0
    %1060 = vmatprep.subr.bf16.mxu0 0
    %1061 = vmatpush1.bf16.xpose.msra.mxu0 0
    %1062 = vmatprep.subr.bf16.mxu0 0
    %1063 = vmatpush1.bf16.xpose.msra.mxu0 0
    %1064 = vmatprep.subr.bf16.mxu0 0
    %1065 = vmatpush1.bf16.xpose.msra.mxu0 0
    %1066 = vmatprep.subr.bf16.mxu0 0
    %1067 = vmatpush1.bf16.xpose.msra.mxu0 0
    %1068 = vmatprep.subr.bf16.mxu0 0
    %1069 = vmatpush1.bf16.xpose.msra.mxu0 0
    %1070 = vmatprep.subr.bf16.mxu0 0
    %1071 = vmatpush1.bf16.xpose.msra.mxu0 0
    %1072 = vmatprep.subr.bf16.mxu0 0
    %1073 = vmatpush1.bf16.xpose.msra.mxu0 0
    %1074 = vmatprep.subr.bf16.mxu0 0
    %1075 = vmatpush1.bf16.xpose.msra.mxu0 0
    %1076 = vmatprep.subr.bf16.mxu0 0
    %1077 = vmatpush1.bf16.xpose.msra.mxu0 0
    %1078 = vmatprep.subr.bf16.mxu0 0
    %1079 = vmatpush1.bf16.xpose.msra.mxu0 0
    %1080 = vmatprep.subr.bf16.mxu0 0
    %1081 = vmatpush1.bf16.xpose.msra.mxu0 0
    %1082 = vmatprep.subr.bf16.mxu0 0
    %1083 = vmatpush1.bf16.xpose.msra.mxu0 0
    %1084 = vmatprep.subr.bf16.mxu0 0
    %1085 = vmatpush1.bf16.xpose.msra.mxu0 0
    %1086 = vmatprep.mubr.bf16.mxu0 0
    %1087 = vmatmul.mubr.bf16.gmra.mrb[0].mxu0 %v1049
    %v1088 = vpop.f32.mrb[0].mxu0
    %v1089 = vadd.f32 0.0, %v1088
    %v1090 = vpop.f32.mrb[0].mxu0
    %v1091 = vpop.f32.mrb[0].mxu0
    %v1092 = vpop.f32.mrb[0].mxu0
    %1093 = vdwg.mxu0
    %1094 = vrot.lane.b32.xlu0 %v228, 104
    %v1095 = vpop.permute.xlu0 %1094
    %1096 = vrot.lane.b32.xlu0 %v230, 104
    %v1097 = vpop.permute.xlu0 %1096
    %v1099 = vsel %vm231, %v1095, 0
    %v1102 = vsel %vm231, %v1097, 0
    %1104 = vmatprep.subr.bf16.mxu0 0
    %1105 = vmatpush1.bf16.xpose.msra.mxu0 %v1102
    %1106 = vmatprep.subr.bf16.mxu0 0
    %1107 = vmatpush1.bf16.xpose.msra.mxu0 0
    %1108 = vmatprep.subr.bf16.mxu0 0
    %1109 = vmatpush1.bf16.xpose.msra.mxu0 0
    %1110 = vmatprep.subr.bf16.mxu0 0
    %1111 = vmatpush1.bf16.xpose.msra.mxu0 0
    %1112 = vmatprep.subr.bf16.mxu0 0
    %1113 = vmatpush1.bf16.xpose.msra.mxu0 0
    %1114 = vmatprep.subr.bf16.mxu0 0
    %1115 = vmatpush1.bf16.xpose.msra.mxu0 0
    %1116 = vmatprep.subr.bf16.mxu0 0
    %1117 = vmatpush1.bf16.xpose.msra.mxu0 0
    %1118 = vmatprep.subr.bf16.mxu0 0
    %1119 = vmatpush1.bf16.xpose.msra.mxu0 0
    %1120 = vmatprep.subr.bf16.mxu0 0
    %1121 = vmatpush1.bf16.xpose.msra.mxu0 0
    %1122 = vmatprep.subr.bf16.mxu0 0
    %1123 = vmatpush1.bf16.xpose.msra.mxu0 0
    %1124 = vmatprep.subr.bf16.mxu0 0
    %1125 = vmatpush1.bf16.xpose.msra.mxu0 0
    %1126 = vmatprep.subr.bf16.mxu0 0
    %1127 = vmatpush1.bf16.xpose.msra.mxu0 0
    %1128 = vmatprep.subr.bf16.mxu0 0
    %1129 = vmatpush1.bf16.xpose.msra.mxu0 0
    %1130 = vmatprep.subr.bf16.mxu0 0
    %1131 = vmatpush1.bf16.xpose.msra.mxu0 0
    %1132 = vmatprep.subr.bf16.mxu0 0
    %1133 = vmatpush1.bf16.xpose.msra.mxu0 0
    %1134 = vmatprep.subr.bf16.mxu0 0
    %1135 = vmatpush1.bf16.xpose.msra.mxu0 0
    %1136 = vmatprep.mubr.bf16.mxu0 0
    %1137 = vmatmul.mubr.bf16.gmra.mrb[0].mxu0 %v1099
    %v1138 = vpop.f32.mrb[0].mxu0
    %v1139 = vadd.f32 0.0, %v1138
    %v1140 = vpop.f32.mrb[0].mxu0
    %v1141 = vpop.f32.mrb[0].mxu0
    %v1142 = vpop.f32.mrb[0].mxu0
    %1143 = vdwg.mxu0
    %v1144 = vmul.f32 %v1089, 0.35355338
    %v1145 = vmul.f32 %v1139, 0.35355338
    %v1146 = vsel %vm231, %v1144, -inf
    %1147 = vmax.xlane.f32.xlu0 %v1146
    %v1148 = vpop.xlane.xlu0 %1147
    %v1149 = vsel %vm231, %v1145, -inf
    %1150 = vmax.xlane.f32.xlu0 %v1149
    %v1151 = vpop.xlane.xlu0 %1150
    %v1152 = vsub.f32 %v1144, %v1148
    %v1153 = vsub.f32 %v1145, %v1151
    %v1154 = vmul.f32 %v1152, 1.442695
    %v1155 = vpow.pop %v1154
    %v1156 = vmul.f32 %v1153, 1.442695
    %v1157 = vpow.pop %v1156
    %v1158 = vsel %vm231, %v1155, 0.0
    %1159 = vadd.xlane.f32.xlu0 %v1158
    %v1160 = vpop.xlane.xlu0 %1159
    %v1161 = vsel %vm231, %v1157, 0.0
    %1162 = vadd.xlane.f32.xlu0 %v1161
    %v1163 = vpop.xlane.xlu0 %1162
    %v1164 = vrcp.pop %v1160
    %v1165 = vrcp.pop %v1163
    %v1166 = vmul.f32 %v1155, %v1164
    %v1167 = vmul.f32 %v1157, %v1165
    %v1168 = vpack.c.bf16 %v1166, %v1166
    %v1169 = vpack.c.bf16 %v1167, %v1167
    %1170 = vrot.lane.b32.xlu0 %v229, 72
    %v1171 = vpop.permute.xlu0 %1170
    %v1173 = vsel %vm231, %v1168, 0
    %v1176 = vsel %vm356, %v1171, 0
    %1178 = vmatprep.subr.bf16.mxu0 0
    %1179 = vmatpush1.bf16.msra.mxu0 %v1176
    %1180 = vmatprep.subr.bf16.mxu0 0
    %1181 = vmatpush1.bf16.msra.mxu0 0
    %1182 = vmatprep.subr.bf16.mxu0 0
    %1183 = vmatpush1.bf16.msra.mxu0 0
    %1184 = vmatprep.subr.bf16.mxu0 0
    %1185 = vmatpush1.bf16.msra.mxu0 0
    %1186 = vmatprep.subr.bf16.mxu0 0
    %1187 = vmatpush1.bf16.msra.mxu0 0
    %1188 = vmatprep.subr.bf16.mxu0 0
    %1189 = vmatpush1.bf16.msra.mxu0 0
    %1190 = vmatprep.subr.bf16.mxu0 0
    %1191 = vmatpush1.bf16.msra.mxu0 0
    %1192 = vmatprep.subr.bf16.mxu0 0
    %1193 = vmatpush1.bf16.msra.mxu0 0
    %1194 = vmatprep.subr.bf16.mxu0 0
    %1195 = vmatpush1.bf16.msra.mxu0 0
    %1196 = vmatprep.subr.bf16.mxu0 0
    %1197 = vmatpush1.bf16.msra.mxu0 0
    %1198 = vmatprep.subr.bf16.mxu0 0
    %1199 = vmatpush1.bf16.msra.mxu0 0
    %1200 = vmatprep.subr.bf16.mxu0 0
    %1201 = vmatpush1.bf16.msra.mxu0 0
    %1202 = vmatprep.subr.bf16.mxu0 0
    %1203 = vmatpush1.bf16.msra.mxu0 0
    %1204 = vmatprep.subr.bf16.mxu0 0
    %1205 = vmatpush1.bf16.msra.mxu0 0
    %1206 = vmatprep.subr.bf16.mxu0 0
    %1207 = vmatpush1.bf16.msra.mxu0 0
    %1208 = vmatprep.subr.bf16.mxu0 0
    %1209 = vmatpush1.bf16.msra.mxu0 0
    %1210 = vmatprep.mubr.bf16.mxu0 0
    %1211 = vmatmul.mubr.bf16.gmra.mrb[0].mxu0 %v1173
    %v1212 = vpop.f32.mrb[0].mxu0
    %v1213 = vadd.f32 0.0, %v1212
    %v1214 = vpop.f32.mrb[0].mxu0
    %v1215 = vpop.f32.mrb[0].mxu0
    %v1216 = vpop.f32.mrb[0].mxu0
    %1217 = vdwg.mxu0
    %1218 = vrot.lane.b32.xlu0 %v230, 72
    %v1219 = vpop.permute.xlu0 %1218
    %v1221 = vsel %vm231, %v1169, 0
    %v1224 = vsel %vm356, %v1219, 0
    %1226 = vmatprep.subr.bf16.mxu0 0
    %1227 = vmatpush1.bf16.msra.mxu0 %v1224
    %1228 = vmatprep.subr.bf16.mxu0 0
    %1229 = vmatpush1.bf16.msra.mxu0 0
    %1230 = vmatprep.subr.bf16.mxu0 0
    %1231 = vmatpush1.bf16.msra.mxu0 0
    %1232 = vmatprep.subr.bf16.mxu0 0
    %1233 = vmatpush1.bf16.msra.mxu0 0
    %1234 = vmatprep.subr.bf16.mxu0 0
    %1235 = vmatpush1.bf16.msra.mxu0 0
    %1236 = vmatprep.subr.bf16.mxu0 0
    %1237 = vmatpush1.bf16.msra.mxu0 0
    %1238 = vmatprep.subr.bf16.mxu0 0
    %1239 = vmatpush1.bf16.msra.mxu0 0
    %1240 = vmatprep.subr.bf16.mxu0 0
    %1241 = vmatpush1.bf16.msra.mxu0 0
    %1242 = vmatprep.subr.bf16.mxu0 0
    %1243 = vmatpush1.bf16.msra.mxu0 0
    %1244 = vmatprep.subr.bf16.mxu0 0
    %1245 = vmatpush1.bf16.msra.mxu0 0
    %1246 = vmatprep.subr.bf16.mxu0 0
    %1247 = vmatpush1.bf16.msra.mxu0 0
    %1248 = vmatprep.subr.bf16.mxu0 0
    %1249 = vmatpush1.bf16.msra.mxu0 0
    %1250 = vmatprep.subr.bf16.mxu0 0
    %1251 = vmatpush1.bf16.msra.mxu0 0
    %1252 = vmatprep.subr.bf16.mxu0 0
    %1253 = vmatpush1.bf16.msra.mxu0 0
    %1254 = vmatprep.subr.bf16.mxu0 0
    %1255 = vmatpush1.bf16.msra.mxu0 0
    %1256 = vmatprep.subr.bf16.mxu0 0
    %1257 = vmatpush1.bf16.msra.mxu0 0
    %1258 = vmatprep.mubr.bf16.mxu0 0
    %1259 = vmatmul.mubr.bf16.gmra.mrb[0].mxu0 %v1221
    %v1260 = vpop.f32.mrb[0].mxu0
    %v1261 = vadd.f32 0.0, %v1260
    %v1262 = vpop.f32.mrb[0].mxu0
    %v1263 = vpop.f32.mrb[0].mxu0
    %v1264 = vpop.f32.mrb[0].mxu0
    %1265 = vdwg.mxu0
    %v1266 = vpack.c.bf16 %v1261, %v1213
    %v1267 = vld [vmem:[%s6 + $0xc] sm:$0xf]
    %v1269 = vsel %vm231, %v1266, 0
    %v1272 = vsel %vm356, %v1267, 0
    %1274 = vmatprep.subr.bf16.mxu0 0
    %1275 = vmatpush1.bf16.msra.mxu0 %v1272
    %1276 = vmatprep.subr.bf16.mxu0 0
    %1277 = vmatpush1.bf16.msra.mxu0 0
    %1278 = vmatprep.subr.bf16.mxu0 0
    %1279 = vmatpush1.bf16.msra.mxu0 0
    %1280 = vmatprep.subr.bf16.mxu0 0
    %1281 = vmatpush1.bf16.msra.mxu0 0
    %1282 = vmatprep.subr.bf16.mxu0 0
    %1283 = vmatpush1.bf16.msra.mxu0 0
    %1284 = vmatprep.subr.bf16.mxu0 0
    %1285 = vmatpush1.bf16.msra.mxu0 0
    %1286 = vmatprep.subr.bf16.mxu0 0
    %1287 = vmatpush1.bf16.msra.mxu0 0
    %1288 = vmatprep.subr.bf16.mxu0 0
    %1289 = vmatpush1.bf16.msra.mxu0 0
    %1290 = vmatprep.subr.bf16.mxu0 0
    %1291 = vmatpush1.bf16.msra.mxu0 0
    %1292 = vmatprep.subr.bf16.mxu0 0
    %1293 = vmatpush1.bf16.msra.mxu0 0
    %1294 = vmatprep.subr.bf16.mxu0 0
    %1295 = vmatpush1.bf16.msra.mxu0 0
    %1296 = vmatprep.subr.bf16.mxu0 0
    %1297 = vmatpush1.bf16.msra.mxu0 0
    %1298 = vmatprep.subr.bf16.mxu0 0
    %1299 = vmatpush1.bf16.msra.mxu0 0
    %1300 = vmatprep.subr.bf16.mxu0 0
    %1301 = vmatpush1.bf16.msra.mxu0 0
    %1302 = vmatprep.subr.bf16.mxu0 0
    %1303 = vmatpush1.bf16.msra.mxu0 0
    %1304 = vmatprep.subr.bf16.mxu0 0
    %1305 = vmatpush1.bf16.msra.mxu0 0
    %1306 = vmatprep.mubr.bf16.mxu0 0
    %1307 = vmatmul.mubr.bf16.gmra.mrb[0].mxu0 %v1269
    %v1308 = vpop.f32.mrb[0].mxu0
    %v1309 = vadd.f32 0.0, %v1308
    %v1310 = vpop.f32.mrb[0].mxu0
    %v1311 = vpop.f32.mrb[0].mxu0
    %v1312 = vadd.f32 0.0, %v1311
    %v1313 = vpop.f32.mrb[0].mxu0
    %1314 = vdwg.mxu0
    %v1315 = vadd.f32 %v1042, %v1309
    %v1316 = vadd.f32 %v1043, %v1312
    %v1317 = vld [vmem:[%s7] sm:$0x1]
    %v1319 = vlaneseq
    %v1320 = vshrl.u32 %v1319, 7
    %v1321 = vsub.s32 0, %v1320
    %v1322 = vrot.slane %v1317, %v1321
    %v1324 = vadd.f32 %v1315, %v1322
    %v1325 = vadd.f32 %v1316, %v1322
    %1326 = vst.msk [vmem:[#allocation10] sm:$0xff] %vm115, %v1324
    %1327 = vst.msk [vmem:[#allocation10 + $0x8] sm:$0xff] %vm115, %v1325
    // Predicated region
    $region50: #{tpu_custom_call.1} parent=1 // pred_check
      _
    $region51: #{tpu_custom_call.1} parent=1 // pred_check_branch
      %1329 = sbr.rel (0) target = $region53
    $region52: #{tpu_custom_call.1} parent=1 // pred_region
      %s1331 = ssub.s32 256, 256
      %1332 = vsyncadd [#allocation4], %s1331
      %s1333 = sshll.u32 [#allocation10], 4
      %s1334 = int_to_ptr.vmem [resolvable:$true] %s1333
      %1339 = dma.vmem_to_hbm [thread:$0]  %s1334, 256, %s8, [#allocation4], 128, 128, 8
    $region53: #{tpu_custom_call.1} parent=1 // pred_fallthru
      _
    // Predicated region
    $region54: #{tpu_custom_call.1} parent=1 // pred_check
      _
    $region55: #{tpu_custom_call.1} parent=1 // pred_check_branch
      %1341 = sbr.rel (0) target = $region57
    $region56: #{tpu_custom_call.1} parent=1 // pred_region
      %1342 = dma.done [#allocation4], 256
    $region57: #{tpu_custom_call.1} parent=1 // pred_fallthru
      _
    %1343 = vsyncpa [#allocation3], 1
    %1344 = vsyncpa [#allocation6], 1
    %1345 = vsyncpa [#allocation9], 1
    %1346 = vsyncpa [#allocation4], 1

</llo_original>
